<compile_context>
chip_gen: v5e
topology: v5e:2x2
jax: 0.10.0
libtpu: 0.0.40
codegen_flags: <defaults>
</compile_context>

<pallas_src>
import functools

import jax
import jax.numpy as jnp
from jax.experimental import pallas as pl
from jax.experimental.pallas import tpu as pltpu

IN_DIM = 20   # flattened action features
HID = 512     # resblock hidden
MID = 512     # resblock_1 output
OUT = 128     # resblock_2 output

K1 = IN_DIM + 1              # x augmented with ones column (bias fold)
N1 = HID + MID               # fused [fc1 | shortcut1] output width
N3 = HID + OUT               # fused [fc3 | shortcut2] output width
NB = MID + HID + OUT + OUT   # packed biases: [b2 | b3 | bsc2 | b4]


# --------------------------------------------------------------------------------------
# Hardware-generation config
# --------------------------------------------------------------------------------------
def _chip_config():
    """Pick batch tile / VMEM limit / VPU dtype per TPU generation (conservative fallback)."""
    kind = ""
    try:
        kind = jax.devices()[0].device_kind.lower()
    except Exception:
        pass
    if "v7" in kind:
        # 64 MiB VMEM per TC, 2 TCs, bf16 VPU.
        return dict(max_tb=512, vmem_limit=44 * 1024 * 1024, bf16_vpu=True,
                    two_cores=True, single_buffer_weights=True)
    if "v6" in kind:
        # 128 MiB VMEM, 1 TC, bf16 VPU.
        return dict(max_tb=1024, vmem_limit=64 * 1024 * 1024, bf16_vpu=True,
                    two_cores=False, single_buffer_weights=False)
    if "v5" in kind:
        # 128 MiB VMEM, 1 TC, no bf16 VPU (would be emulated -> keep f32 VPU chain).
        return dict(max_tb=1024, vmem_limit=64 * 1024 * 1024, bf16_vpu=False,
                    two_cores=False, single_buffer_weights=False)
    # Unknown part: conservative defaults (no explicit limit, small tile, f32 VPU chain).
    return dict(max_tb=512, vmem_limit=None, bf16_vpu=False,
                two_cores=False, single_buffer_weights=False)


# --------------------------------------------------------------------------------------
# Kernel
# --------------------------------------------------------------------------------------
def action_encoder_kernel(x_ref, w1a_ref, w2_ref, w3c_ref, w4_ref, b_ref, o_ref, *, bf16_vpu):
    bf = jnp.bfloat16

    # ---- ResBlock 1 ----
    # Fused MXU push: [fc1(x)+b1 | shortcut1(x)+bsc1]  (biases folded via ones column in x)
    z1 = jnp.dot(x_ref[...], w1a_ref[...], preferred_element_type=jnp.float32)   # (tb, 1024)
    sc1 = z1[:, HID:]                                                             # (tb, 512) f32
    if bf16_vpu:
        h = jnp.maximum(z1[:, :HID].astype(bf), 0.0)                              # relu in bf16
    else:
        h = jnp.maximum(z1[:, :HID], 0.0).astype(bf)

    h2 = jnp.dot(h, w2_ref[...], preferred_element_type=jnp.float32) + b_ref[:, :MID]
    y1f = h2 + sc1
    if bf16_vpu:
        y1 = jnp.maximum(y1f.astype(bf), 0.0)
    else:
        y1 = jnp.maximum(y1f, 0.0).astype(bf)

    # ---- ResBlock 2 ----
    # Fused MXU push: [fc3(y1) | shortcut2(y1)]
    z2 = jnp.dot(y1, w3c_ref[...],
                 preferred_element_type=jnp.float32) + b_ref[:, MID:MID + N3]     # (tb, 640)
    sc2 = z2[:, HID:]                                                             # (tb, 128)
    if bf16_vpu:
        h3 = jnp.maximum(z2[:, :HID].astype(bf), 0.0)
    else:
        h3 = jnp.maximum(z2[:, :HID], 0.0).astype(bf)

    h4 = jnp.dot(h3, w4_ref[...],
                 preferred_element_type=jnp.float32) + b_ref[:, MID + N3:]        # (tb, 128)
    o_ref[...] = jnp.maximum(h4 + sc2, 0.0).astype(o_ref.dtype)


# --------------------------------------------------------------------------------------
# Parameter packing / wrapper
# --------------------------------------------------------------------------------------
def pack_params(p):
    """Pre-fuse / pre-cast logical (f32, (in,out)-layout) params for the kernel."""
    bf = jnp.bfloat16
    w1c = jnp.concatenate([p["w1"], p["wsc1"]], axis=1)                  # (20, 1024)
    b1c = jnp.concatenate([p["b1"], p["bsc1"]], axis=1)                  # (1, 1024)
    w1a = jnp.concatenate([w1c, b1c], axis=0).astype(bf)                 # (21, 1024)
    w3c = jnp.concatenate([p["w3"], p["wsc2"]], axis=1).astype(bf)       # (512, 640)
    bias = jnp.concatenate([p["b2"], p["b3"], p["bsc2"], p["b4"]],
                           axis=1).astype(jnp.float32)                   # (1, 1280)
    return {
        "w1a": w1a,
        "w2": p["w2"].astype(bf),
        "w3c": w3c,
        "w4": p["w4"].astype(bf),
        "bias": bias,
    }


def action_encoder(action, packed, *, out_dtype=jnp.float32):
    """action: any shape (B, ...) flattening to (B, 20). packed: output of pack_params."""
    cfg = _chip_config()

    B = action.shape[0]
    x = action.reshape(B, -1).astype(jnp.float32)
    assert x.shape[1] == IN_DIM, f"flattened feature dim must be {IN_DIM}"

    # Append ones column so b1/bsc1 fold into the fused first matmul; cast operands to bf16.
    x_aug = jnp.concatenate([x, jnp.ones((B, 1), jnp.float32)], axis=-1).astype(jnp.bfloat16)

    # Padding-minimizing batch tile: split B as evenly as possible, round tile to sublane (8).
    max_tb = cfg["max_tb"]
    n_blocks = max(1, -(-B // max_tb))
    tb = -(-B // n_blocks)
    tb = ((tb + 7) // 8) * 8
    n_blocks = -(-B // tb)
    Bp = n_blocks * tb
    if Bp != B:
        x_aug = jnp.pad(x_aug, ((0, Bp - B), (0, 0)))

    # v7x: only shard across both TensorCores when the batch is big enough to be
    # compute-bound; otherwise keep the ~1.4 MB weight stream on a single core.
    if cfg["two_cores"]:
        semantics = ("parallel",) if (n_blocks >= 2 and Bp >= 2048) else ("arbitrary",)
    else:
        semantics = ("parallel",)

    # Weight / bias specs: block index never changes -> single-buffer on VMEM-tight v7x.
    if cfg["single_buffer_weights"]:
        def const_spec(shape):
            return pl.BlockSpec(shape, lambda i: (0, 0), pipeline_mode=pl.Buffered(1))
    else:
        def const_spec(shape):
            return pl.BlockSpec(shape, lambda i: (0, 0))

    out_itemsize = jnp.dtype(out_dtype).itemsize
    flops = 2 * Bp * (K1 * N1 + HID * MID + MID * N3 + HID * OUT)
    weight_bytes = 2 * (K1 * N1 + HID * MID + MID * N3 + HID * OUT) + 4 * NB
    io_bytes = Bp * K1 * 2 + Bp * OUT * out_itemsize

    compiler_kwargs = dict(dimension_semantics=semantics)
    if cfg["vmem_limit"] is not None:
        compiler_kwargs["vmem_limit_bytes"] = cfg["vmem_limit"]

    kernel = functools.partial(action_encoder_kernel, bf16_vpu=cfg["bf16_vpu"])

    out = pl.pallas_call(
        kernel,
        out_shape=jax.ShapeDtypeStruct((Bp, OUT), out_dtype),
        grid_spec=pltpu.PrefetchScalarGridSpec(
            num_scalar_prefetch=0,
            grid=(n_blocks,),
            in_specs=[
                pl.BlockSpec((tb, K1), lambda i: (i, 0)),   # x tile, blocked on batch
                const_spec((K1, N1)),                       # fused w1|wsc1 (+bias row)
                const_spec((HID, MID)),                     # w2
                const_spec((MID, N3)),                      # fused w3|wsc2
                const_spec((HID, OUT)),                     # w4
                const_spec((1, NB)),                        # packed biases
            ],
            out_specs=pl.BlockSpec((tb, OUT), lambda i: (i, 0)),
        ),
        compiler_params=pltpu.CompilerParams(**compiler_kwargs),
        cost_estimate=pl.CostEstimate(
            flops=flops, transcendentals=0, bytes_accessed=weight_bytes + io_bytes),
    )(x_aug, packed["w1a"], packed["w2"], packed["w3c"], packed["w4"], packed["bias"])

    return out[:B] if Bp != B else out


# --------------------------------------------------------------------------------------
# Synthetic params / references
# --------------------------------------------------------------------------------------
def init_params(key):
    """Deterministic synthetic weights. Linear weights stored (in, out); bias (1, out)."""
    ks = jax.random.split(key, 6)

    def lin(k, fan_in, fan_out):
        return jax.random.normal(k, (fan_in, fan_out), jnp.float32) * (1.0 / jnp.sqrt(fan_in))

    return {
        # ResBlock(20, 512, 512)
        "w1": lin(ks[0], IN_DIM, HID),   "b1": jnp.zeros((1, HID), jnp.float32) + 0.01,
        "w2": lin(ks[1], HID, MID),      "b2": jnp.zeros((1, MID), jnp.float32) + 0.01,
        "wsc1": lin(ks[2], IN_DIM, MID), "bsc1": jnp.zeros((1, MID), jnp.float32),
        # ResBlock(512, 512, 128)
        "w3": lin(ks[3], MID, HID),      "b3": jnp.zeros((1, HID), jnp.float32) + 0.01,
        "w4": lin(ks[4], HID, OUT),      "b4": jnp.zeros((1, OUT), jnp.float32) + 0.01,
        "wsc2": lin(ks[5], MID, OUT),    "bsc2": jnp.zeros((1, OUT), jnp.float32),
    }


def reference_mixed(action, p):
    """Pure-JAX reference mirroring the kernel's mixed precision (bf16 operands, f32 accum)."""
    bf = jnp.bfloat16
    B = action.shape[0]
    x = action.reshape(B, -1).astype(jnp.float32)
    x_aug = jnp.concatenate([x, jnp.ones((B, 1), jnp.float32)], -1).astype(bf)

    w1c = jnp.concatenate([p["w1"], p["wsc1"]], axis=1)
    b1c = jnp.concatenate([p["b1"], p["bsc1"]], axis=1)
    w1a = jnp.concatenate([w1c, b1c], axis=0).astype(bf)

    z1 = jnp.dot(x_aug, w1a, preferred_element_type=jnp.float32)
    h = jnp.maximum(z1[:, :HID], 0.0)
    sc1 = z1[:, HID:]
    h2 = jnp.dot(h.astype(bf), p["w2"].astype(bf), preferred_element_type=jnp.float32) + p["b2"]
    y1 = jnp.maximum(h2 + sc1, 0.0)

    w3c = jnp.concatenate([p["w3"], p["wsc2"]], axis=1).astype(bf)
    b3c = jnp.concatenate([p["b3"], p["bsc2"]], axis=1)
    z2 = jnp.dot(y1.astype(bf), w3c, preferred_element_type=jnp.float32) + b3c
    h3 = jnp.maximum(z2[:, :HID], 0.0)
    sc2 = z2[:, HID:]
    h4 = jnp.dot(h3.astype(bf), p["w4"].astype(bf), preferred_element_type=jnp.float32) + p["b4"]
    return jnp.maximum(h4 + sc2, 0.0)


def reference_f32(action, p):
    """Pure-f32 reference matching the PyTorch module semantics."""
    B = action.shape[0]
    x = action.reshape(B, -1).astype(jnp.float32)

    def resblock(x, w1, b1, w2, b2, wsc, bsc):
        h = jnp.maximum(x @ w1 + b1, 0.0)
        return jnp.maximum(h @ w2 + b2 + (x @ wsc + bsc), 0.0)

    y1 = resblock(x, p["w1"], p["b1"], p["w2"], p["b2"], p["wsc1"], p["bsc1"])
    return resblock(y1, p["w3"], p["b3"], p["w4"], p["b4"], p["wsc2"], p["bsc2"])


# --------------------------------------------------------------------------------------
if __name__ == "__main__":
    key = jax.random.PRNGKey(0)
    k_act, k_par = jax.random.split(key)

    B = 8
    # action: (B, 4, 5) -> Flatten -> (B, 20)
    action = jax.random.normal(k_act, (B, 4, 5), jnp.float32)
    params = init_params(k_par)
    packed = pack_params(params)

    # f32 output path (default, matches module dtype)
    out = action_encoder(action, packed)
    out = jax.block_until_ready(out)
    assert out.shape == (B, OUT)

    # Mixed-precision reference (mirrors kernel dtype path) — tight tolerance.
    ref_m = reference_mixed(action, params)
    assert jnp.allclose(out, ref_m, atol=2e-2, rtol=2e-2), "mismatch vs mixed-precision reference"

    # Pure-f32 reference (true PyTorch semantics) — bf16-operand tolerance.
    ref_f = reference_f32(action, params)
    assert jnp.allclose(out, ref_f, atol=1e-1, rtol=5e-2), "mismatch vs pure-f32 reference"

    # bf16 output path (halves writeback when the consumer tolerates it)
    out_bf = action_encoder(action, packed, out_dtype=jnp.bfloat16)
    out_bf = jax.block_until_ready(out_bf)
    assert out_bf.shape == (B, OUT) and out_bf.dtype == jnp.bfloat16
    assert jnp.allclose(out_bf.astype(jnp.float32), ref_m, atol=2e-1, rtol=5e-2)

    print("KERNEL_OK")
</pallas_src>

<mosaic_0001>
module attributes {stable_mosaic.version = 11 : i64} {
  func.func @action_encoder_kernel(%arg0: i32, %arg1: memref<8x21xbf16, #tpu.memory_space<vmem>>, %arg2: memref<21x1024xbf16, #tpu.memory_space<vmem>>, %arg3: memref<512x512xbf16, #tpu.memory_space<vmem>>, %arg4: memref<512x640xbf16, #tpu.memory_space<vmem>>, %arg5: memref<512x128xbf16, #tpu.memory_space<vmem>>, %arg6: memref<1x1280xf32, #tpu.memory_space<vmem>>, %arg7: memref<8x128xf32, #tpu.memory_space<vmem>>) attributes {dimension_semantics = [#tpu.dimension_semantics<parallel>], iteration_bounds = array<i64: 1>, scalar_prefetch = 0 : i64, scratch_operands = 0 : i64, tpu.core_type = #tpu.core_type<tc>, window_params = [{transform_indices = @transform_0, window_bounds = array<i64: 8, 21>}, {pipeline_mode = #tpu.pipeline_mode<synchronous>, transform_indices = @transform_1, window_bounds = array<i64: 21, 1024>}, {pipeline_mode = #tpu.pipeline_mode<synchronous>, transform_indices = @transform_2, window_bounds = array<i64: 512, 512>}, {pipeline_mode = #tpu.pipeline_mode<synchronous>, transform_indices = @transform_3, window_bounds = array<i64: 512, 640>}, {pipeline_mode = #tpu.pipeline_mode<synchronous>, transform_indices = @transform_4, window_bounds = array<i64: 512, 128>}, {pipeline_mode = #tpu.pipeline_mode<synchronous>, transform_indices = @transform_5, window_bounds = array<i64: 1, 1280>}, {transform_indices = @transform_6, window_bounds = array<i64: 8, 128>}]} {
    %c0 = arith.constant 0 : index
    %c0_0 = arith.constant 0 : index
    %0 = vector.load %arg1[%c0, %c0_0] : memref<8x21xbf16, #tpu.memory_space<vmem>>, vector<8x21xbf16>
    %c0_1 = arith.constant 0 : index
    %c0_2 = arith.constant 0 : index
    %1 = vector.load %arg2[%c0_1, %c0_2] : memref<21x1024xbf16, #tpu.memory_space<vmem>>, vector<21x1024xbf16>
    %cst = arith.constant dense<0.000000e+00> : vector<8x1024xf32>
    %2 = tpu.matmul %0, %1, %cst {dimension_numbers = #tpu.dot_dimension_numbers<[1], [0], [0], [1], [0, 0, 1, 1], [], []>} : vector<8x21xbf16>, vector<21x1024xbf16>, vector<8x1024xf32> -> vector<8x1024xf32>
    %3 = vector.extract_strided_slice %2 {offsets = [0, 512], sizes = [8, 512], strides = [1, 1]} : vector<8x1024xf32> to vector<8x512xf32>
    %4 = vector.extract_strided_slice %2 {offsets = [0, 0], sizes = [8, 512], strides = [1, 1]} : vector<8x1024xf32> to vector<8x512xf32>
    %cst_3 = arith.constant 0.000000e+00 : f32
    %5 = vector.broadcast %cst_3 : f32 to vector<8x512xf32>
    %6 = arith.maximumf %4, %5 : vector<8x512xf32>
    %7 = arith.truncf %6 : vector<8x512xf32> to vector<8x512xbf16>
    %c0_4 = arith.constant 0 : index
    %c0_5 = arith.constant 0 : index
    %8 = vector.load %arg3[%c0_4, %c0_5] : memref<512x512xbf16, #tpu.memory_space<vmem>>, vector<512x512xbf16>
    %cst_6 = arith.constant dense<0.000000e+00> : vector<8x512xf32>
    %9 = tpu.matmul %7, %8, %cst_6 {dimension_numbers = #tpu.dot_dimension_numbers<[1], [0], [0], [1], [0, 0, 1, 1], [], []>} : vector<8x512xbf16>, vector<512x512xbf16>, vector<8x512xf32> -> vector<8x512xf32>
    %c0_7 = arith.constant 0 : index
    %c0_8 = arith.constant 0 : index
    %10 = vector.load %arg6[%c0_7, %c0_8] : memref<1x1280xf32, #tpu.memory_space<vmem>>, vector<1x512xf32>
    %11 = vector.broadcast %10 : vector<1x512xf32> to vector<8x512xf32>
    %12 = arith.addf %9, %11 : vector<8x512xf32>
    %13 = arith.addf %12, %3 : vector<8x512xf32>
    %cst_9 = arith.constant 0.000000e+00 : f32
    %14 = vector.broadcast %cst_9 : f32 to vector<8x512xf32>
    %15 = arith.maximumf %13, %14 : vector<8x512xf32>
    %16 = arith.truncf %15 : vector<8x512xf32> to vector<8x512xbf16>
    %c0_10 = arith.constant 0 : index
    %c0_11 = arith.constant 0 : index
    %17 = vector.load %arg4[%c0_10, %c0_11] : memref<512x640xbf16, #tpu.memory_space<vmem>>, vector<512x640xbf16>
    %cst_12 = arith.constant dense<0.000000e+00> : vector<8x640xf32>
    %18 = tpu.matmul %16, %17, %cst_12 {dimension_numbers = #tpu.dot_dimension_numbers<[1], [0], [0], [1], [0, 0, 1, 1], [], []>} : vector<8x512xbf16>, vector<512x640xbf16>, vector<8x640xf32> -> vector<8x640xf32>
    %c0_13 = arith.constant 0 : index
    %c512 = arith.constant 512 : index
    %19 = vector.load %arg6[%c0_13, %c512] : memref<1x1280xf32, #tpu.memory_space<vmem>>, vector<1x640xf32>
    %20 = vector.broadcast %19 : vector<1x640xf32> to vector<8x640xf32>
    %21 = arith.addf %18, %20 : vector<8x640xf32>
    %22 = vector.extract_strided_slice %21 {offsets = [0, 512], sizes = [8, 128], strides = [1, 1]} : vector<8x640xf32> to vector<8x128xf32>
    %23 = vector.extract_strided_slice %21 {offsets = [0, 0], sizes = [8, 512], strides = [1, 1]} : vector<8x640xf32> to vector<8x512xf32>
    %cst_14 = arith.constant 0.000000e+00 : f32
    %24 = vector.broadcast %cst_14 : f32 to vector<8x512xf32>
    %25 = arith.maximumf %23, %24 : vector<8x512xf32>
    %26 = arith.truncf %25 : vector<8x512xf32> to vector<8x512xbf16>
    %c0_15 = arith.constant 0 : index
    %c0_16 = arith.constant 0 : index
    %27 = vector.load %arg5[%c0_15, %c0_16] : memref<512x128xbf16, #tpu.memory_space<vmem>>, vector<512x128xbf16>
    %cst_17 = arith.constant dense<0.000000e+00> : vector<8x128xf32>
    %28 = tpu.matmul %26, %27, %cst_17 {dimension_numbers = #tpu.dot_dimension_numbers<[1], [0], [0], [1], [0, 0, 1, 1], [], []>} : vector<8x512xbf16>, vector<512x128xbf16>, vector<8x128xf32> -> vector<8x128xf32>
    %c0_18 = arith.constant 0 : index
    %c1152 = arith.constant 1152 : index
    %29 = vector.load %arg6[%c0_18, %c1152] : memref<1x1280xf32, #tpu.memory_space<vmem>>, vector<1x128xf32>
    %30 = vector.broadcast %29 : vector<1x128xf32> to vector<8x128xf32>
    %31 = arith.addf %28, %30 : vector<8x128xf32>
    %32 = arith.addf %31, %22 : vector<8x128xf32>
    %cst_19 = arith.constant 0.000000e+00 : f32
    %33 = vector.broadcast %cst_19 : f32 to vector<8x128xf32>
    %34 = arith.maximumf %32, %33 : vector<8x128xf32>
    %c0_20 = arith.constant 0 : index
    %c0_21 = arith.constant 0 : index
    %35 = vector.load %arg7[%c0_20, %c0_21] : memref<8x128xf32, #tpu.memory_space<vmem>>, vector<8x128xf32>
    tpu.vector_store %arg7[%c0_20, %c0_21], %34 {strides = array<i32>} : memref<8x128xf32, #tpu.memory_space<vmem>>, vector<8x128xf32>,
    return
  }
  func.func @transform_0(%arg0: i32) -> (i32, i32) {
    %c0_i32 = arith.constant 0 : i32
    %c0_i32_0 = arith.constant 0 : i32
    return %arg0, %c0_i32 : i32, i32
  }
  func.func @transform_1(%arg0: i32) -> (i32, i32) {
    %c0_i32 = arith.constant 0 : i32
    %c0_i32_0 = arith.constant 0 : i32
    %c0_i32_1 = arith.constant 0 : i32
    return %c0_i32, %c0_i32_0 : i32, i32
  }
  func.func @transform_2(%arg0: i32) -> (i32, i32) {
    %c0_i32 = arith.constant 0 : i32
    %c0_i32_0 = arith.constant 0 : i32
    %c0_i32_1 = arith.constant 0 : i32
    return %c0_i32, %c0_i32_0 : i32, i32
  }
  func.func @transform_3(%arg0: i32) -> (i32, i32) {
    %c0_i32 = arith.constant 0 : i32
    %c0_i32_0 = arith.constant 0 : i32
    %c0_i32_1 = arith.constant 0 : i32
    return %c0_i32, %c0_i32_0 : i32, i32
  }
  func.func @transform_4(%arg0: i32) -> (i32, i32) {
    %c0_i32 = arith.constant 0 : i32
    %c0_i32_0 = arith.constant 0 : i32
    %c0_i32_1 = arith.constant 0 : i32
    return %c0_i32, %c0_i32_0 : i32, i32
  }
  func.func @transform_5(%arg0: i32) -> (i32, i32) {
    %c0_i32 = arith.constant 0 : i32
    %c0_i32_0 = arith.constant 0 : i32
    %c0_i32_1 = arith.constant 0 : i32
    return %c0_i32, %c0_i32_0 : i32, i32
  }
  func.func @transform_6(%arg0: i32) -> (i32, i32) {
    %c0_i32 = arith.constant 0 : i32
    %c0_i32_0 = arith.constant 0 : i32
    return %arg0, %c0_i32 : i32, i32
  }
}

</mosaic_0001>

<llo_original>
// kernel: tpu_custom_call.1
$region0: #{tpu_custom_call.1}
  #allocation0 [shape = 'u32[]', space=smem, size = 0x4, offset = 0x4, fixed_abs, tag = 'smem constant byte address 0x4 - core index']
  #allocation1 [shape = 'u32[72,128]{1,0:T(1,128)}', space=vmem, size = 0x9000, scoped, tag = 'internal scratch']
  %s0 = inlined_call_operand.hbm [shape: bf16[8,21], index: 0, kind: input, shape index: {}]
  %s1 = inlined_call_operand.hbm [shape: bf16[21,1024], index: 1, kind: input, shape index: {}]
  %s2 = inlined_call_operand.hbm [shape: bf16[512,512], index: 2, kind: input, shape index: {}]
  %s3 = inlined_call_operand.hbm [shape: bf16[512,640], index: 3, kind: input, shape index: {}]
  %s4 = inlined_call_operand.hbm [shape: bf16[512,128], index: 4, kind: input, shape index: {}]
  %s5 = inlined_call_operand.hbm [shape: f32[1,1280], index: 5, kind: input, shape index: {}]
  %s6 = inlined_call_operand.hbm [shape: f32[8,128], index: 6, kind: output, shape index: {}]
  %s7 = sld [smem:[#allocation0]]
  $region58: #{tpu_custom_call.1} parent=0
    _
  %s9 = ssub.s32 1, %s7
  %s10 = scalar_select 0, %s9, %s7
  $region1: #{tpu_custom_call.1} parent=0
    #allocation2 [shape = 'u8[2048]{0}', space=vmem, size = 0x800, scoped, tag = 'input window, operand 0, single buffered']
    #allocation3 [shape = 's32[1]{0}', space=sflag, size = 0x4, scoped, tag = 'scoped memory for tpu_custom_call.1']
    #allocation4 [shape = 's32[1]{0}', space=sflag, size = 0x4, scoped, tag = 'scoped memory for tpu_custom_call.1']
    #allocation5 [shape = 'u8[49152]{0}', space=vmem, size = 0xc000, scoped, tag = 'input window, operand 1, single buffered']
    #allocation6 [shape = 's32[1]{0}', space=sflag, size = 0x4, scoped, tag = 'scoped memory for tpu_custom_call.1']
    #allocation7 [shape = 'u8[524288]{0}', space=vmem, size = 0x80000, scoped, tag = 'input window, operand 2, single buffered']
    #allocation8 [shape = 'u8[655360]{0}', space=vmem, size = 0xa0000, scoped, tag = 'input window, operand 3, single buffered']
    #allocation9 [shape = 's32[1]{0}', space=sflag, size = 0x4, scoped, tag = 'scoped memory for tpu_custom_call.1']
    #allocation10 [shape = 'u8[131072]{0}', space=vmem, size = 0x20000, scoped, tag = 'input window, operand 4, single buffered']
    #allocation11 [shape = 'u8[5120]{0}', space=vmem, size = 0x1400, scoped, tag = 'input window, operand 5, single buffered']
    #allocation12 [shape = 's32[1]{0}', space=sflag, size = 0x4, scoped, tag = 'scoped memory for tpu_custom_call.1']
    #allocation13 [shape = 'u8[4096]{0}', space=vmem, size = 0x1000, scoped, tag = 'output window, operand 0, single buffered']
    %11 = vsyncpa [#allocation3], 0
    %12 = vsyncpa [#allocation6], 0
    %13 = vsyncpa [#allocation9], 0
    %14 = vsyncpa [#allocation12], 0
    %15 = vsyncpa [#allocation4], 0
    // Predicated region
    $region2: #{tpu_custom_call.1} parent=1 // pred_check
      _
    $region3: #{tpu_custom_call.1} parent=1 // pred_check_branch
      %17 = sbr.rel (0) target = $region5
    $region4: #{tpu_custom_call.1} parent=1 // pred_region
      %19 = vsyncadd [#allocation3], 0
      %s21 = sshll.u32 %s0, 4
      %s22 = int_to_ptr.hbm [resolvable:$true] %s21
      %s23 = sshll.u32 [#allocation2], 4
      %s24 = int_to_ptr.vmem [resolvable:$true] %s23
      %26 = dma.hbm_to_vmem [thread:$0]  %s22, 64, %s24, [#allocation3]
    $region5: #{tpu_custom_call.1} parent=1 // pred_fallthru
      _
    // Predicated region
    $region6: #{tpu_custom_call.1} parent=1 // pred_check
      _
    $region7: #{tpu_custom_call.1} parent=1 // pred_check_branch
      %28 = sbr.rel (0) target = $region9
    $region8: #{tpu_custom_call.1} parent=1 // pred_region
      %30 = vsyncadd [#allocation6], 0
      %s31 = sshll.u32 %s1, 4
      %s32 = int_to_ptr.hbm [resolvable:$true] %s31
      %s33 = sshll.u32 [#allocation5], 4
      %s34 = int_to_ptr.vmem [resolvable:$true] %s33
      %39 = dma.hbm_to_vmem [thread:$0]  %s32, 1536, %s34, [#allocation6], 512, 512, 32
    $region9: #{tpu_custom_call.1} parent=1 // pred_fallthru
      _
    // Predicated region
    $region10: #{tpu_custom_call.1} parent=1 // pred_check
      _
    $region11: #{tpu_custom_call.1} parent=1 // pred_check_branch
      %41 = sbr.rel (0) target = $region13
    $region12: #{tpu_custom_call.1} parent=1 // pred_region
      %43 = vsyncadd [#allocation6], 0
      %s44 = sshll.u32 %s2, 4
      %s45 = int_to_ptr.hbm [resolvable:$true] %s44
      %s46 = sshll.u32 [#allocation7], 4
      %s47 = int_to_ptr.vmem [resolvable:$true] %s46
      %52 = dma.hbm_to_vmem [thread:$0]  %s45, 16384, %s47, [#allocation6], 256, 256, 16
    $region13: #{tpu_custom_call.1} parent=1 // pred_fallthru
      _
    // Predicated region
    $region14: #{tpu_custom_call.1} parent=1 // pred_check
      _
    $region15: #{tpu_custom_call.1} parent=1 // pred_check_branch
      %54 = sbr.rel (0) target = $region17
    $region16: #{tpu_custom_call.1} parent=1 // pred_region
      %56 = vsyncadd [#allocation9], 0
      %s57 = sshll.u32 %s3, 4
      %s58 = int_to_ptr.hbm [resolvable:$true] %s57
      %s59 = sshll.u32 [#allocation8], 4
      %s60 = int_to_ptr.vmem [resolvable:$true] %s59
      %65 = dma.hbm_to_vmem [thread:$0]  %s58, 20480, %s60, [#allocation9], 320, 320, 20
    $region17: #{tpu_custom_call.1} parent=1 // pred_fallthru
      _
    // Predicated region
    $region18: #{tpu_custom_call.1} parent=1 // pred_check
      _
    $region19: #{tpu_custom_call.1} parent=1 // pred_check_branch
      %67 = sbr.rel (0) target = $region21
    $region20: #{tpu_custom_call.1} parent=1 // pred_region
      %69 = vsyncadd [#allocation9], 0
      %s70 = sshll.u32 %s4, 4
      %s71 = int_to_ptr.hbm [resolvable:$true] %s70
      %s72 = sshll.u32 [#allocation10], 4
      %s73 = int_to_ptr.vmem [resolvable:$true] %s72
      %78 = dma.hbm_to_vmem [thread:$0]  %s71, 4096, %s73, [#allocation9], 64, 64, 4
    $region21: #{tpu_custom_call.1} parent=1 // pred_fallthru
      _
    // Predicated region
    $region22: #{tpu_custom_call.1} parent=1 // pred_check
      _
    $region23: #{tpu_custom_call.1} parent=1 // pred_check_branch
      %80 = sbr.rel (0) target = $region25
    $region24: #{tpu_custom_call.1} parent=1 // pred_region
      %82 = vsyncadd [#allocation12], 0
      %s84 = sshll.u32 %s5, 4
      %s85 = int_to_ptr.hbm [resolvable:$true] %s84
      %s86 = sshll.u32 [#allocation11], 4
      %s87 = int_to_ptr.vmem [resolvable:$true] %s86
      %89 = dma.hbm_to_vmem [thread:$0]  %s85, 160, %s87, [#allocation12]
    $region25: #{tpu_custom_call.1} parent=1 // pred_fallthru
      _
    // Predicated region
    $region26: #{tpu_custom_call.1} parent=1 // pred_check
      _
    $region27: #{tpu_custom_call.1} parent=1 // pred_check_branch
      %91 = sbr.rel (0) target = $region29
    $region28: #{tpu_custom_call.1} parent=1 // pred_region
      %93 = dma.done [#allocation3], 64
    $region29: #{tpu_custom_call.1} parent=1 // pred_fallthru
      _
    // Predicated region
    $region30: #{tpu_custom_call.1} parent=1 // pred_check
      _
    $region31: #{tpu_custom_call.1} parent=1 // pred_check_branch
      %95 = sbr.rel (0) target = $region33
    $region32: #{tpu_custom_call.1} parent=1 // pred_region
      %97 = dma.done [#allocation6], 1536
    $region33: #{tpu_custom_call.1} parent=1 // pred_fallthru
      _
    // Predicated region
    $region34: #{tpu_custom_call.1} parent=1 // pred_check
      _
    $region35: #{tpu_custom_call.1} parent=1 // pred_check_branch
      %99 = sbr.rel (0) target = $region37
    $region36: #{tpu_custom_call.1} parent=1 // pred_region
      %101 = dma.done [#allocation6], 16384
    $region37: #{tpu_custom_call.1} parent=1 // pred_fallthru
      _
    // Predicated region
    $region38: #{tpu_custom_call.1} parent=1 // pred_check
      _
    $region39: #{tpu_custom_call.1} parent=1 // pred_check_branch
      %103 = sbr.rel (0) target = $region41
    $region40: #{tpu_custom_call.1} parent=1 // pred_region
      %105 = dma.done [#allocation9], 20480
    $region41: #{tpu_custom_call.1} parent=1 // pred_fallthru
      _
    // Predicated region
    $region42: #{tpu_custom_call.1} parent=1 // pred_check
      _
    $region43: #{tpu_custom_call.1} parent=1 // pred_check_branch
      %107 = sbr.rel (0) target = $region45
    $region44: #{tpu_custom_call.1} parent=1 // pred_region
      %109 = dma.done [#allocation9], 4096
    $region45: #{tpu_custom_call.1} parent=1 // pred_fallthru
      _
    // Predicated region
    $region46: #{tpu_custom_call.1} parent=1 // pred_check
      _
    $region47: #{tpu_custom_call.1} parent=1 // pred_check_branch
      %111 = sbr.rel (0) target = $region49
    $region48: #{tpu_custom_call.1} parent=1 // pred_region
      %113 = dma.done [#allocation12], 160
    $region49: #{tpu_custom_call.1} parent=1 // pred_fallthru
      _
    %v115 = vld [vmem:[#allocation2] sm:$0xf]
    %v116 = vld [vmem:[#allocation5] sm:$0xff]
    %v117 = vld [vmem:[#allocation5 + $0x8] sm:$0xff]
    %v118 = vld [vmem:[#allocation5 + $0x10] sm:$0xff]
    %v119 = vld [vmem:[#allocation5 + $0x18] sm:$0xff]
    %v120 = vld [vmem:[#allocation5 + $0x20] sm:$0xff]
    %v121 = vld [vmem:[#allocation5 + $0x28] sm:$0xff]
    %v122 = vld [vmem:[#allocation5 + $0x30] sm:$0xff]
    %v123 = vld [vmem:[#allocation5 + $0x38] sm:$0xff]
    %v124 = vld [vmem:[#allocation5 + $0x40] sm:$0x77]
    %v125 = vld [vmem:[#allocation5 + $0x48] sm:$0x77]
    %v126 = vld [vmem:[#allocation5 + $0x50] sm:$0x77]
    %v127 = vld [vmem:[#allocation5 + $0x58] sm:$0x77]
    %v140 = vunpack.c.l.b16 %v116
    %v141 = vunpack.c.h.b16 %v116
    %v142 = vunpack.c.l.b16 %v117
    %v143 = vunpack.c.h.b16 %v117
    %v144 = vunpack.c.l.b16 %v118
    %v145 = vunpack.c.h.b16 %v118
    %v146 = vunpack.c.l.b16 %v119
    %v147 = vunpack.c.h.b16 %v119
    %v148 = vunpack.c.l.b16 %v120
    %v149 = vunpack.c.h.b16 %v120
    %v150 = vunpack.c.l.b16 %v121
    %v151 = vunpack.c.h.b16 %v121
    %v152 = vunpack.c.l.b16 %v122
    %v153 = vunpack.c.h.b16 %v122
    %v154 = vunpack.c.l.b16 %v123
    %v155 = vunpack.c.h.b16 %v123
    %v156 = vunpack.c.l.b16 %v124
    %v157 = vunpack.c.h.b16 %v124
    %v158 = vunpack.c.l.b16 %v125
    %v159 = vunpack.c.h.b16 %v125
    %v160 = vunpack.c.l.b16 %v126
    %v161 = vunpack.c.h.b16 %v126
    %v162 = vunpack.c.l.b16 %v127
    %v163 = vunpack.c.h.b16 %v127
    %v164 = vpack.c.b16 %v148, %v140
    %v165 = vpack.c.b16 %v149, %v141
    %v166 = vpack.c.b16 %v150, %v142
    %v167 = vpack.c.b16 %v151, %v143
    %v168 = vpack.c.b16 %v152, %v144
    %v169 = vpack.c.b16 %v153, %v145
    %v170 = vpack.c.b16 %v154, %v146
    %v171 = vpack.c.b16 %v155, %v147
    %v172 = vpack.c.b16 %v156, %v156
    %v173 = vpack.c.b16 %v157, %v157
    %v174 = vpack.c.b16 %v158, %v158
    %v175 = vpack.c.b16 %v159, %v159
    %v176 = vpack.c.b16 %v160, %v160
    %v177 = vpack.c.b16 %v161, %v161
    %v178 = vpack.c.b16 %v162, %v162
    %v179 = vpack.c.b16 %v163, %v163
    %vm188 = vcmask 171008
    %v190 = vsel %vm188, %v115, 0
    %vm192 = vcmask 1041408
    %vm193 = vcmask 1042432
    %v194 = vsel %vm192, 4294967295, 65535
    %v195 = vsel %vm193, %v194, 0
    %v197 = vand.u32 %v172, %v195
    %v200 = vand.u32 %v173, %v195
    %v203 = vand.u32 %v174, %v195
    %v206 = vand.u32 %v175, %v195
    %v209 = vand.u32 %v176, %v195
    %v212 = vand.u32 %v177, %v195
    %v215 = vand.u32 %v178, %v195
    %v218 = vand.u32 %v179, %v195
    %220 = vmatpush.bf16.msra.mxu0 0
    %221 = vmatpush.bf16.msra.mxu0 0
    %222 = vmatpush.bf16.msra.mxu0 0
    %223 = vmatpush.bf16.msra.mxu0 0
    %224 = vmatpush.bf16.msra.mxu0 0
    %225 = vmatpush.bf16.msra.mxu0 0
    %226 = vmatpush.bf16.msra.mxu0 %v197
    %227 = vmatpush.bf16.msra.mxu0 %v164
    %228 = vmatmul.bf16.gmra.mxu0 %v190
    %v229 = vpop.f32.mrf.mxu0
    %v230 = vadd.f32 0.0, %v229
    %v231 = vpop.f32.mrf.mxu0
    %232 = vdwg.mxu0
    %233 = vmatpush.bf16.msra.mxu0 0
    %234 = vmatpush.bf16.msra.mxu0 0
    %235 = vmatpush.bf16.msra.mxu0 0
    %236 = vmatpush.bf16.msra.mxu0 0
    %237 = vmatpush.bf16.msra.mxu0 0
    %238 = vmatpush.bf16.msra.mxu0 0
    %239 = vmatpush.bf16.msra.mxu0 %v200
    %240 = vmatpush.bf16.msra.mxu0 %v165
    %241 = vmatmul.bf16.gmra.mxu0 %v190
    %v242 = vpop.f32.mrf.mxu0
    %v243 = vadd.f32 0.0, %v242
    %v244 = vpop.f32.mrf.mxu0
    %245 = vdwg.mxu0
    %246 = vmatpush.bf16.msra.mxu0 0
    %247 = vmatpush.bf16.msra.mxu0 0
    %248 = vmatpush.bf16.msra.mxu0 0
    %249 = vmatpush.bf16.msra.mxu0 0
    %250 = vmatpush.bf16.msra.mxu0 0
    %251 = vmatpush.bf16.msra.mxu0 0
    %252 = vmatpush.bf16.msra.mxu0 %v203
    %253 = vmatpush.bf16.msra.mxu0 %v166
    %254 = vmatmul.bf16.gmra.mxu0 %v190
    %v255 = vpop.f32.mrf.mxu0
    %v256 = vadd.f32 0.0, %v255
    %v257 = vpop.f32.mrf.mxu0
    %258 = vdwg.mxu0
    %259 = vmatpush.bf16.msra.mxu0 0
    %260 = vmatpush.bf16.msra.mxu0 0
    %261 = vmatpush.bf16.msra.mxu0 0
    %262 = vmatpush.bf16.msra.mxu0 0
    %263 = vmatpush.bf16.msra.mxu0 0
    %264 = vmatpush.bf16.msra.mxu0 0
    %265 = vmatpush.bf16.msra.mxu0 %v206
    %266 = vmatpush.bf16.msra.mxu0 %v167
    %267 = vmatmul.bf16.gmra.mxu0 %v190
    %v268 = vpop.f32.mrf.mxu0
    %v269 = vadd.f32 0.0, %v268
    %v270 = vpop.f32.mrf.mxu0
    %271 = vdwg.mxu0
    %272 = vmatpush.bf16.msra.mxu0 0
    %273 = vmatpush.bf16.msra.mxu0 0
    %274 = vmatpush.bf16.msra.mxu0 0
    %275 = vmatpush.bf16.msra.mxu0 0
    %276 = vmatpush.bf16.msra.mxu0 0
    %277 = vmatpush.bf16.msra.mxu0 0
    %278 = vmatpush.bf16.msra.mxu0 %v209
    %279 = vmatpush.bf16.msra.mxu0 %v168
    %280 = vmatmul.bf16.gmra.mxu0 %v190
    %v281 = vpop.f32.mrf.mxu0
    %v282 = vadd.f32 0.0, %v281
    %v283 = vpop.f32.mrf.mxu0
    %284 = vdwg.mxu0
    %285 = vmatpush.bf16.msra.mxu0 0
    %286 = vmatpush.bf16.msra.mxu0 0
    %287 = vmatpush.bf16.msra.mxu0 0
    %288 = vmatpush.bf16.msra.mxu0 0
    %289 = vmatpush.bf16.msra.mxu0 0
    %290 = vmatpush.bf16.msra.mxu0 0
    %291 = vmatpush.bf16.msra.mxu0 %v212
    %292 = vmatpush.bf16.msra.mxu0 %v169
    %293 = vmatmul.bf16.gmra.mxu0 %v190
    %v294 = vpop.f32.mrf.mxu0
    %v295 = vadd.f32 0.0, %v294
    %v296 = vpop.f32.mrf.mxu0
    %297 = vdwg.mxu0
    %298 = vmatpush.bf16.msra.mxu0 0
    %299 = vmatpush.bf16.msra.mxu0 0
    %300 = vmatpush.bf16.msra.mxu0 0
    %301 = vmatpush.bf16.msra.mxu0 0
    %302 = vmatpush.bf16.msra.mxu0 0
    %303 = vmatpush.bf16.msra.mxu0 0
    %304 = vmatpush.bf16.msra.mxu0 %v215
    %305 = vmatpush.bf16.msra.mxu0 %v170
    %306 = vmatmul.bf16.gmra.mxu0 %v190
    %v307 = vpop.f32.mrf.mxu0
    %v308 = vadd.f32 0.0, %v307
    %v309 = vpop.f32.mrf.mxu0
    %310 = vdwg.mxu0
    %311 = vmatpush.bf16.msra.mxu0 0
    %312 = vmatpush.bf16.msra.mxu0 0
    %313 = vmatpush.bf16.msra.mxu0 0
    %314 = vmatpush.bf16.msra.mxu0 0
    %315 = vmatpush.bf16.msra.mxu0 0
    %316 = vmatpush.bf16.msra.mxu0 0
    %317 = vmatpush.bf16.msra.mxu0 %v218
    %318 = vmatpush.bf16.msra.mxu0 %v171
    %319 = vmatmul.bf16.gmra.mxu0 %v190
    %v320 = vpop.f32.mrf.mxu0
    %v321 = vadd.f32 0.0, %v320
    %v322 = vpop.f32.mrf.mxu0
    %323 = vdwg.mxu0
    %v324 = vmax.f32 %v230, 0.0
    %v325 = vmax.f32 %v243, 0.0
    %v326 = vmax.f32 %v256, 0.0
    %v327 = vmax.f32 %v269, 0.0
    %v328 = vpack.c.bf16 %v324, %v324
    %v329 = vpack.c.bf16 %v325, %v325
    %v330 = vpack.c.bf16 %v326, %v326
    %v331 = vpack.c.bf16 %v327, %v327
    %v332 = vld [vmem:[#allocation7] sm:$0xff]
    %v333 = vld [vmem:[#allocation7 + $0x8] sm:$0xff]
    %v334 = vld [vmem:[#allocation7 + $0x10] sm:$0xff]
    %v335 = vld [vmem:[#allocation7 + $0x18] sm:$0xff]
    %v336 = vld [vmem:[#allocation7 + $0x20] sm:$0xff]
    %v337 = vld [vmem:[#allocation7 + $0x28] sm:$0xff]
    %v338 = vld [vmem:[#allocation7 + $0x30] sm:$0xff]
    %v339 = vld [vmem:[#allocation7 + $0x38] sm:$0xff]
    %v340 = vld [vmem:[#allocation7 + $0x40] sm:$0xff]
    %v341 = vld [vmem:[#allocation7 + $0x48] sm:$0xff]
    %v342 = vld [vmem:[#allocation7 + $0x50] sm:$0xff]
    %v343 = vld [vmem:[#allocation7 + $0x58] sm:$0xff]
    %v344 = vld [vmem:[#allocation7 + $0x60] sm:$0xff]
    %v345 = vld [vmem:[#allocation7 + $0x68] sm:$0xff]
    %v346 = vld [vmem:[#allocation7 + $0x70] sm:$0xff]
    %v347 = vld [vmem:[#allocation7 + $0x78] sm:$0xff]
    %v348 = vld [vmem:[#allocation7 + $0x80] sm:$0xff]
    %v349 = vld [vmem:[#allocation7 + $0x88] sm:$0xff]
    %v350 = vld [vmem:[#allocation7 + $0x90] sm:$0xff]
    %v351 = vld [vmem:[#allocation7 + $0x98] sm:$0xff]
    %v352 = vld [vmem:[#allocation7 + $0xa0] sm:$0xff]
    %v353 = vld [vmem:[#allocation7 + $0xa8] sm:$0xff]
    %v354 = vld [vmem:[#allocation7 + $0xb0] sm:$0xff]
    %v355 = vld [vmem:[#allocation7 + $0xb8] sm:$0xff]
    %v356 = vld [vmem:[#allocation7 + $0xc0] sm:$0xff]
    %v357 = vld [vmem:[#allocation7 + $0xc8] sm:$0xff]
    %v358 = vld [vmem:[#allocation7 + $0xd0] sm:$0xff]
    %v359 = vld [vmem:[#allocation7 + $0xd8] sm:$0xff]
    %v360 = vld [vmem:[#allocation7 + $0xe0] sm:$0xff]
    %v361 = vld [vmem:[#allocation7 + $0xe8] sm:$0xff]
    %v362 = vld [vmem:[#allocation7 + $0xf0] sm:$0xff]
    %v363 = vld [vmem:[#allocation7 + $0xf8] sm:$0xff]
    %v364 = vld [vmem:[#allocation7 + $0x100] sm:$0xff]
    %v365 = vld [vmem:[#allocation7 + $0x108] sm:$0xff]
    %v366 = vld [vmem:[#allocation7 + $0x110] sm:$0xff]
    %v367 = vld [vmem:[#allocation7 + $0x118] sm:$0xff]
    %v368 = vld [vmem:[#allocation7 + $0x120] sm:$0xff]
    %v369 = vld [vmem:[#allocation7 + $0x128] sm:$0xff]
    %v370 = vld [vmem:[#allocation7 + $0x130] sm:$0xff]
    %v371 = vld [vmem:[#allocation7 + $0x138] sm:$0xff]
    %v372 = vld [vmem:[#allocation7 + $0x140] sm:$0xff]
    %v373 = vld [vmem:[#allocation7 + $0x148] sm:$0xff]
    %v374 = vld [vmem:[#allocation7 + $0x150] sm:$0xff]
    %v375 = vld [vmem:[#allocation7 + $0x158] sm:$0xff]
    %v376 = vld [vmem:[#allocation7 + $0x160] sm:$0xff]
    %v377 = vld [vmem:[#allocation7 + $0x168] sm:$0xff]
    %v378 = vld [vmem:[#allocation7 + $0x170] sm:$0xff]
    %v379 = vld [vmem:[#allocation7 + $0x178] sm:$0xff]
    %v380 = vld [vmem:[#allocation7 + $0x180] sm:$0xff]
    %v381 = vld [vmem:[#allocation7 + $0x188] sm:$0xff]
    %v382 = vld [vmem:[#allocation7 + $0x190] sm:$0xff]
    %v383 = vld [vmem:[#allocation7 + $0x198] sm:$0xff]
    %v384 = vld [vmem:[#allocation7 + $0x1a0] sm:$0xff]
    %v385 = vld [vmem:[#allocation7 + $0x1a8] sm:$0xff]
    %v386 = vld [vmem:[#allocation7 + $0x1b0] sm:$0xff]
    %v387 = vld [vmem:[#allocation7 + $0x1b8] sm:$0xff]
    %v388 = vld [vmem:[#allocation7 + $0x1c0] sm:$0xff]
    %v389 = vld [vmem:[#allocation7 + $0x1c8] sm:$0xff]
    %v390 = vld [vmem:[#allocation7 + $0x1d0] sm:$0xff]
    %v391 = vld [vmem:[#allocation7 + $0x1d8] sm:$0xff]
    %v392 = vld [vmem:[#allocation7 + $0x1e0] sm:$0xff]
    %v393 = vld [vmem:[#allocation7 + $0x1e8] sm:$0xff]
    %v394 = vld [vmem:[#allocation7 + $0x1f0] sm:$0xff]
    %v395 = vld [vmem:[#allocation7 + $0x1f8] sm:$0xff]
    %v396 = vld [vmem:[#allocation7 + $0x200] sm:$0xff]
    %v397 = vld [vmem:[#allocation7 + $0x208] sm:$0xff]
    %v398 = vld [vmem:[#allocation7 + $0x210] sm:$0xff]
    %v399 = vld [vmem:[#allocation7 + $0x218] sm:$0xff]
    %v400 = vld [vmem:[#allocation7 + $0x220] sm:$0xff]
    %v401 = vld [vmem:[#allocation7 + $0x228] sm:$0xff]
    %v402 = vld [vmem:[#allocation7 + $0x230] sm:$0xff]
    %v403 = vld [vmem:[#allocation7 + $0x238] sm:$0xff]
    %v404 = vld [vmem:[#allocation7 + $0x240] sm:$0xff]
    %v405 = vld [vmem:[#allocation7 + $0x248] sm:$0xff]
    %v406 = vld [vmem:[#allocation7 + $0x250] sm:$0xff]
    %v407 = vld [vmem:[#allocation7 + $0x258] sm:$0xff]
    %v408 = vld [vmem:[#allocation7 + $0x260] sm:$0xff]
    %v409 = vld [vmem:[#allocation7 + $0x268] sm:$0xff]
    %v410 = vld [vmem:[#allocation7 + $0x270] sm:$0xff]
    %v411 = vld [vmem:[#allocation7 + $0x278] sm:$0xff]
    %v412 = vld [vmem:[#allocation7 + $0x280] sm:$0xff]
    %v413 = vld [vmem:[#allocation7 + $0x288] sm:$0xff]
    %v414 = vld [vmem:[#allocation7 + $0x290] sm:$0xff]
    %v415 = vld [vmem:[#allocation7 + $0x298] sm:$0xff]
    %v416 = vld [vmem:[#allocation7 + $0x2a0] sm:$0xff]
    %v417 = vld [vmem:[#allocation7 + $0x2a8] sm:$0xff]
    %v418 = vld [vmem:[#allocation7 + $0x2b0] sm:$0xff]
    %v419 = vld [vmem:[#allocation7 + $0x2b8] sm:$0xff]
    %v420 = vld [vmem:[#allocation7 + $0x2c0] sm:$0xff]
    %v421 = vld [vmem:[#allocation7 + $0x2c8] sm:$0xff]
    %v422 = vld [vmem:[#allocation7 + $0x2d0] sm:$0xff]
    %v423 = vld [vmem:[#allocation7 + $0x2d8] sm:$0xff]
    %v424 = vld [vmem:[#allocation7 + $0x2e0] sm:$0xff]
    %v425 = vld [vmem:[#allocation7 + $0x2e8] sm:$0xff]
    %v426 = vld [vmem:[#allocation7 + $0x2f0] sm:$0xff]
    %v427 = vld [vmem:[#allocation7 + $0x2f8] sm:$0xff]
    %v428 = vld [vmem:[#allocation7 + $0x300] sm:$0xff]
    %v429 = vld [vmem:[#allocation7 + $0x308] sm:$0xff]
    %v430 = vld [vmem:[#allocation7 + $0x310] sm:$0xff]
    %v431 = vld [vmem:[#allocation7 + $0x318] sm:$0xff]
    %v432 = vld [vmem:[#allocation7 + $0x320] sm:$0xff]
    %v433 = vld [vmem:[#allocation7 + $0x328] sm:$0xff]
    %v434 = vld [vmem:[#allocation7 + $0x330] sm:$0xff]
    %v435 = vld [vmem:[#allocation7 + $0x338] sm:$0xff]
    %v436 = vld [vmem:[#allocation7 + $0x340] sm:$0xff]
    %v437 = vld [vmem:[#allocation7 + $0x348] sm:$0xff]
    %v438 = vld [vmem:[#allocation7 + $0x350] sm:$0xff]
    %v439 = vld [vmem:[#allocation7 + $0x358] sm:$0xff]
    %v440 = vld [vmem:[#allocation7 + $0x360] sm:$0xff]
    %v441 = vld [vmem:[#allocation7 + $0x368] sm:$0xff]
    %v442 = vld [vmem:[#allocation7 + $0x370] sm:$0xff]
    %v443 = vld [vmem:[#allocation7 + $0x378] sm:$0xff]
    %v444 = vld [vmem:[#allocation7 + $0x380] sm:$0xff]
    %v445 = vld [vmem:[#allocation7 + $0x388] sm:$0xff]
    %v446 = vld [vmem:[#allocation7 + $0x390] sm:$0xff]
    %v447 = vld [vmem:[#allocation7 + $0x398] sm:$0xff]
    %v448 = vld [vmem:[#allocation7 + $0x3a0] sm:$0xff]
    %v449 = vld [vmem:[#allocation7 + $0x3a8] sm:$0xff]
    %v450 = vld [vmem:[#allocation7 + $0x3b0] sm:$0xff]
    %v451 = vld [vmem:[#allocation7 + $0x3b8] sm:$0xff]
    %v452 = vld [vmem:[#allocation7 + $0x3c0] sm:$0xff]
    %v453 = vld [vmem:[#allocation7 + $0x3c8] sm:$0xff]
    %v454 = vld [vmem:[#allocation7 + $0x3d0] sm:$0xff]
    %v455 = vld [vmem:[#allocation7 + $0x3d8] sm:$0xff]
    %v456 = vld [vmem:[#allocation7 + $0x3e0] sm:$0xff]
    %v457 = vld [vmem:[#allocation7 + $0x3e8] sm:$0xff]
    %v458 = vld [vmem:[#allocation7 + $0x3f0] sm:$0xff]
    %v459 = vld [vmem:[#allocation7 + $0x3f8] sm:$0xff]
    %v460 = vld [vmem:[#allocation11] sm:$0xf]
    %v462 = vperm.slane %v460, 0
    %v463 = vperm.slane %v460, 1
    %v464 = vperm.slane %v460, 2
    %v465 = vperm.slane %v460, 3
    %v598 = vunpack.c.l.b16 %v332
    %v599 = vunpack.c.h.b16 %v332
    %v600 = vunpack.c.l.b16 %v333
    %v601 = vunpack.c.h.b16 %v333
    %v602 = vunpack.c.l.b16 %v334
    %v603 = vunpack.c.h.b16 %v334
    %v604 = vunpack.c.l.b16 %v335
    %v605 = vunpack.c.h.b16 %v335
    %v606 = vunpack.c.l.b16 %v336
    %v607 = vunpack.c.h.b16 %v336
    %v608 = vunpack.c.l.b16 %v337
    %v609 = vunpack.c.h.b16 %v337
    %v610 = vunpack.c.l.b16 %v338
    %v611 = vunpack.c.h.b16 %v338
    %v612 = vunpack.c.l.b16 %v339
    %v613 = vunpack.c.h.b16 %v339
    %v614 = vunpack.c.l.b16 %v340
    %v615 = vunpack.c.h.b16 %v340
    %v616 = vunpack.c.l.b16 %v341
    %v617 = vunpack.c.h.b16 %v341
    %v618 = vunpack.c.l.b16 %v342
    %v619 = vunpack.c.h.b16 %v342
    %v620 = vunpack.c.l.b16 %v343
    %v621 = vunpack.c.h.b16 %v343
    %v622 = vunpack.c.l.b16 %v344
    %v623 = vunpack.c.h.b16 %v344
    %v624 = vunpack.c.l.b16 %v345
    %v625 = vunpack.c.h.b16 %v345
    %v626 = vunpack.c.l.b16 %v346
    %v627 = vunpack.c.h.b16 %v346
    %v628 = vunpack.c.l.b16 %v347
    %v629 = vunpack.c.h.b16 %v347
    %v630 = vunpack.c.l.b16 %v348
    %v631 = vunpack.c.h.b16 %v348
    %v632 = vunpack.c.l.b16 %v349
    %v633 = vunpack.c.h.b16 %v349
    %v634 = vunpack.c.l.b16 %v350
    %v635 = vunpack.c.h.b16 %v350
    %v636 = vunpack.c.l.b16 %v351
    %v637 = vunpack.c.h.b16 %v351
    %v638 = vunpack.c.l.b16 %v352
    %v639 = vunpack.c.h.b16 %v352
    %v640 = vunpack.c.l.b16 %v353
    %v641 = vunpack.c.h.b16 %v353
    %v642 = vunpack.c.l.b16 %v354
    %v643 = vunpack.c.h.b16 %v354
    %v644 = vunpack.c.l.b16 %v355
    %v645 = vunpack.c.h.b16 %v355
    %v646 = vunpack.c.l.b16 %v356
    %v647 = vunpack.c.h.b16 %v356
    %v648 = vunpack.c.l.b16 %v357
    %v649 = vunpack.c.h.b16 %v357
    %v650 = vunpack.c.l.b16 %v358
    %v651 = vunpack.c.h.b16 %v358
    %v652 = vunpack.c.l.b16 %v359
    %v653 = vunpack.c.h.b16 %v359
    %v654 = vunpack.c.l.b16 %v360
    %v655 = vunpack.c.h.b16 %v360
    %v656 = vunpack.c.l.b16 %v361
    %v657 = vunpack.c.h.b16 %v361
    %v658 = vunpack.c.l.b16 %v362
    %v659 = vunpack.c.h.b16 %v362
    %v660 = vunpack.c.l.b16 %v363
    %v661 = vunpack.c.h.b16 %v363
    %v662 = vunpack.c.l.b16 %v364
    %v663 = vunpack.c.h.b16 %v364
    %v664 = vunpack.c.l.b16 %v365
    %v665 = vunpack.c.h.b16 %v365
    %v666 = vunpack.c.l.b16 %v366
    %v667 = vunpack.c.h.b16 %v366
    %v668 = vunpack.c.l.b16 %v367
    %v669 = vunpack.c.h.b16 %v367
    %v670 = vunpack.c.l.b16 %v368
    %v671 = vunpack.c.h.b16 %v368
    %v672 = vunpack.c.l.b16 %v369
    %v673 = vunpack.c.h.b16 %v369
    %v674 = vunpack.c.l.b16 %v370
    %v675 = vunpack.c.h.b16 %v370
    %v676 = vunpack.c.l.b16 %v371
    %v677 = vunpack.c.h.b16 %v371
    %v678 = vunpack.c.l.b16 %v372
    %v679 = vunpack.c.h.b16 %v372
    %v680 = vunpack.c.l.b16 %v373
    %v681 = vunpack.c.h.b16 %v373
    %v682 = vunpack.c.l.b16 %v374
    %v683 = vunpack.c.h.b16 %v374
    %v684 = vunpack.c.l.b16 %v375
    %v685 = vunpack.c.h.b16 %v375
    %v686 = vunpack.c.l.b16 %v376
    %v687 = vunpack.c.h.b16 %v376
    %v688 = vunpack.c.l.b16 %v377
    %v689 = vunpack.c.h.b16 %v377
    %v690 = vunpack.c.l.b16 %v378
    %v691 = vunpack.c.h.b16 %v378
    %v692 = vunpack.c.l.b16 %v379
    %v693 = vunpack.c.h.b16 %v379
    %v694 = vunpack.c.l.b16 %v380
    %v695 = vunpack.c.h.b16 %v380
    %v696 = vunpack.c.l.b16 %v381
    %v697 = vunpack.c.h.b16 %v381
    %v698 = vunpack.c.l.b16 %v382
    %v699 = vunpack.c.h.b16 %v382
    %v700 = vunpack.c.l.b16 %v383
    %v701 = vunpack.c.h.b16 %v383
    %v702 = vunpack.c.l.b16 %v384
    %v703 = vunpack.c.h.b16 %v384
    %v704 = vunpack.c.l.b16 %v385
    %v705 = vunpack.c.h.b16 %v385
    %v706 = vunpack.c.l.b16 %v386
    %v707 = vunpack.c.h.b16 %v386
    %v708 = vunpack.c.l.b16 %v387
    %v709 = vunpack.c.h.b16 %v387
    %v710 = vunpack.c.l.b16 %v388
    %v711 = vunpack.c.h.b16 %v388
    %v712 = vunpack.c.l.b16 %v389
    %v713 = vunpack.c.h.b16 %v389
    %v714 = vunpack.c.l.b16 %v390
    %v715 = vunpack.c.h.b16 %v390
    %v716 = vunpack.c.l.b16 %v391
    %v717 = vunpack.c.h.b16 %v391
    %v718 = vunpack.c.l.b16 %v392
    %v719 = vunpack.c.h.b16 %v392
    %v720 = vunpack.c.l.b16 %v393
    %v721 = vunpack.c.h.b16 %v393
    %v722 = vunpack.c.l.b16 %v394
    %v723 = vunpack.c.h.b16 %v394
    %v724 = vunpack.c.l.b16 %v395
    %v725 = vunpack.c.h.b16 %v395
    %v726 = vunpack.c.l.b16 %v396
    %v727 = vunpack.c.h.b16 %v396
    %v728 = vunpack.c.l.b16 %v397
    %v729 = vunpack.c.h.b16 %v397
    %v730 = vunpack.c.l.b16 %v398
    %v731 = vunpack.c.h.b16 %v398
    %v732 = vunpack.c.l.b16 %v399
    %v733 = vunpack.c.h.b16 %v399
    %v734 = vunpack.c.l.b16 %v400
    %v735 = vunpack.c.h.b16 %v400
    %v736 = vunpack.c.l.b16 %v401
    %v737 = vunpack.c.h.b16 %v401
    %v738 = vunpack.c.l.b16 %v402
    %v739 = vunpack.c.h.b16 %v402
    %v740 = vunpack.c.l.b16 %v403
    %v741 = vunpack.c.h.b16 %v403
    %v742 = vunpack.c.l.b16 %v404
    %v743 = vunpack.c.h.b16 %v404
    %v744 = vunpack.c.l.b16 %v405
    %v745 = vunpack.c.h.b16 %v405
    %v746 = vunpack.c.l.b16 %v406
    %v747 = vunpack.c.h.b16 %v406
    %v748 = vunpack.c.l.b16 %v407
    %v749 = vunpack.c.h.b16 %v407
    %v750 = vunpack.c.l.b16 %v408
    %v751 = vunpack.c.h.b16 %v408
    %v752 = vunpack.c.l.b16 %v409
    %v753 = vunpack.c.h.b16 %v409
    %v754 = vunpack.c.l.b16 %v410
    %v755 = vunpack.c.h.b16 %v410
    %v756 = vunpack.c.l.b16 %v411
    %v757 = vunpack.c.h.b16 %v411
    %v758 = vunpack.c.l.b16 %v412
    %v759 = vunpack.c.h.b16 %v412
    %v760 = vunpack.c.l.b16 %v413
    %v761 = vunpack.c.h.b16 %v413
    %v762 = vunpack.c.l.b16 %v414
    %v763 = vunpack.c.h.b16 %v414
    %v764 = vunpack.c.l.b16 %v415
    %v765 = vunpack.c.h.b16 %v415
    %v766 = vunpack.c.l.b16 %v416
    %v767 = vunpack.c.h.b16 %v416
    %v768 = vunpack.c.l.b16 %v417
    %v769 = vunpack.c.h.b16 %v417
    %v770 = vunpack.c.l.b16 %v418
    %v771 = vunpack.c.h.b16 %v418
    %v772 = vunpack.c.l.b16 %v419
    %v773 = vunpack.c.h.b16 %v419
    %v774 = vunpack.c.l.b16 %v420
    %v775 = vunpack.c.h.b16 %v420
    %v776 = vunpack.c.l.b16 %v421
    %v777 = vunpack.c.h.b16 %v421
    %v778 = vunpack.c.l.b16 %v422
    %v779 = vunpack.c.h.b16 %v422
    %v780 = vunpack.c.l.b16 %v423
    %v781 = vunpack.c.h.b16 %v423
    %v782 = vunpack.c.l.b16 %v424
    %v783 = vunpack.c.h.b16 %v424
    %v784 = vunpack.c.l.b16 %v425
    %v785 = vunpack.c.h.b16 %v425
    %v786 = vunpack.c.l.b16 %v426
    %v787 = vunpack.c.h.b16 %v426
    %v788 = vunpack.c.l.b16 %v427
    %v789 = vunpack.c.h.b16 %v427
    %v790 = vunpack.c.l.b16 %v428
    %v791 = vunpack.c.h.b16 %v428
    %v792 = vunpack.c.l.b16 %v429
    %v793 = vunpack.c.h.b16 %v429
    %v794 = vunpack.c.l.b16 %v430
    %v795 = vunpack.c.h.b16 %v430
    %v796 = vunpack.c.l.b16 %v431
    %v797 = vunpack.c.h.b16 %v431
    %v798 = vunpack.c.l.b16 %v432
    %v799 = vunpack.c.h.b16 %v432
    %v800 = vunpack.c.l.b16 %v433
    %v801 = vunpack.c.h.b16 %v433
    %v802 = vunpack.c.l.b16 %v434
    %v803 = vunpack.c.h.b16 %v434
    %v804 = vunpack.c.l.b16 %v435
    %v805 = vunpack.c.h.b16 %v435
    %v806 = vunpack.c.l.b16 %v436
    %v807 = vunpack.c.h.b16 %v436
    %v808 = vunpack.c.l.b16 %v437
    %v809 = vunpack.c.h.b16 %v437
    %v810 = vunpack.c.l.b16 %v438
    %v811 = vunpack.c.h.b16 %v438
    %v812 = vunpack.c.l.b16 %v439
    %v813 = vunpack.c.h.b16 %v439
    %v814 = vunpack.c.l.b16 %v440
    %v815 = vunpack.c.h.b16 %v440
    %v816 = vunpack.c.l.b16 %v441
    %v817 = vunpack.c.h.b16 %v441
    %v818 = vunpack.c.l.b16 %v442
    %v819 = vunpack.c.h.b16 %v442
    %v820 = vunpack.c.l.b16 %v443
    %v821 = vunpack.c.h.b16 %v443
    %v822 = vunpack.c.l.b16 %v444
    %v823 = vunpack.c.h.b16 %v444
    %v824 = vunpack.c.l.b16 %v445
    %v825 = vunpack.c.h.b16 %v445
    %v826 = vunpack.c.l.b16 %v446
    %v827 = vunpack.c.h.b16 %v446
    %v828 = vunpack.c.l.b16 %v447
    %v829 = vunpack.c.h.b16 %v447
    %v830 = vunpack.c.l.b16 %v448
    %v831 = vunpack.c.h.b16 %v448
    %v832 = vunpack.c.l.b16 %v449
    %v833 = vunpack.c.h.b16 %v449
    %v834 = vunpack.c.l.b16 %v450
    %v835 = vunpack.c.h.b16 %v450
    %v836 = vunpack.c.l.b16 %v451
    %v837 = vunpack.c.h.b16 %v451
    %v838 = vunpack.c.l.b16 %v452
    %v839 = vunpack.c.h.b16 %v452
    %v840 = vunpack.c.l.b16 %v453
    %v841 = vunpack.c.h.b16 %v453
    %v842 = vunpack.c.l.b16 %v454
    %v843 = vunpack.c.h.b16 %v454
    %v844 = vunpack.c.l.b16 %v455
    %v845 = vunpack.c.h.b16 %v455
    %v846 = vunpack.c.l.b16 %v456
    %v847 = vunpack.c.h.b16 %v456
    %v848 = vunpack.c.l.b16 %v457
    %v849 = vunpack.c.h.b16 %v457
    %v850 = vunpack.c.l.b16 %v458
    %v851 = vunpack.c.h.b16 %v458
    %v852 = vunpack.c.l.b16 %v459
    %v853 = vunpack.c.h.b16 %v459
    %v854 = vpack.c.b16 %v602, %v598
    %v855 = vpack.c.b16 %v603, %v599
    %v856 = vpack.c.b16 %v604, %v600
    %v857 = vpack.c.b16 %v605, %v601
    %v858 = vpack.c.b16 %v610, %v606
    %v859 = vpack.c.b16 %v611, %v607
    %v860 = vpack.c.b16 %v612, %v608
    %v861 = vpack.c.b16 %v613, %v609
    %v862 = vpack.c.b16 %v618, %v614
    %v863 = vpack.c.b16 %v619, %v615
    %v864 = vpack.c.b16 %v620, %v616
    %v865 = vpack.c.b16 %v621, %v617
    %v866 = vpack.c.b16 %v626, %v622
    %v867 = vpack.c.b16 %v627, %v623
    %v868 = vpack.c.b16 %v628, %v624
    %v869 = vpack.c.b16 %v629, %v625
    %v870 = vpack.c.b16 %v634, %v630
    %v871 = vpack.c.b16 %v635, %v631
    %v872 = vpack.c.b16 %v636, %v632
    %v873 = vpack.c.b16 %v637, %v633
    %v874 = vpack.c.b16 %v642, %v638
    %v875 = vpack.c.b16 %v643, %v639
    %v876 = vpack.c.b16 %v644, %v640
    %v877 = vpack.c.b16 %v645, %v641
    %v878 = vpack.c.b16 %v650, %v646
    %v879 = vpack.c.b16 %v651, %v647
    %v880 = vpack.c.b16 %v652, %v648
    %v881 = vpack.c.b16 %v653, %v649
    %v882 = vpack.c.b16 %v658, %v654
    %v883 = vpack.c.b16 %v659, %v655
    %v884 = vpack.c.b16 %v660, %v656
    %v885 = vpack.c.b16 %v661, %v657
    %v886 = vpack.c.b16 %v666, %v662
    %v887 = vpack.c.b16 %v667, %v663
    %v888 = vpack.c.b16 %v668, %v664
    %v889 = vpack.c.b16 %v669, %v665
    %v890 = vpack.c.b16 %v674, %v670
    %v891 = vpack.c.b16 %v675, %v671
    %v892 = vpack.c.b16 %v676, %v672
    %v893 = vpack.c.b16 %v677, %v673
    %v894 = vpack.c.b16 %v682, %v678
    %v895 = vpack.c.b16 %v683, %v679
    %v896 = vpack.c.b16 %v684, %v680
    %v897 = vpack.c.b16 %v685, %v681
    %v898 = vpack.c.b16 %v690, %v686
    %v899 = vpack.c.b16 %v691, %v687
    %v900 = vpack.c.b16 %v692, %v688
    %v901 = vpack.c.b16 %v693, %v689
    %v902 = vpack.c.b16 %v698, %v694
    %v903 = vpack.c.b16 %v699, %v695
    %v904 = vpack.c.b16 %v700, %v696
    %v905 = vpack.c.b16 %v701, %v697
    %v906 = vpack.c.b16 %v706, %v702
    %v907 = vpack.c.b16 %v707, %v703
    %v908 = vpack.c.b16 %v708, %v704
    %v909 = vpack.c.b16 %v709, %v705
    %v910 = vpack.c.b16 %v714, %v710
    %v911 = vpack.c.b16 %v715, %v711
    %v912 = vpack.c.b16 %v716, %v712
    %v913 = vpack.c.b16 %v717, %v713
    %v914 = vpack.c.b16 %v722, %v718
    %v915 = vpack.c.b16 %v723, %v719
    %v916 = vpack.c.b16 %v724, %v720
    %v917 = vpack.c.b16 %v725, %v721
    %v918 = vpack.c.b16 %v730, %v726
    %v919 = vpack.c.b16 %v731, %v727
    %v920 = vpack.c.b16 %v732, %v728
    %v921 = vpack.c.b16 %v733, %v729
    %v922 = vpack.c.b16 %v738, %v734
    %v923 = vpack.c.b16 %v739, %v735
    %v924 = vpack.c.b16 %v740, %v736
    %v925 = vpack.c.b16 %v741, %v737
    %v926 = vpack.c.b16 %v746, %v742
    %v927 = vpack.c.b16 %v747, %v743
    %v928 = vpack.c.b16 %v748, %v744
    %v929 = vpack.c.b16 %v749, %v745
    %v930 = vpack.c.b16 %v754, %v750
    %v931 = vpack.c.b16 %v755, %v751
    %v932 = vpack.c.b16 %v756, %v752
    %v933 = vpack.c.b16 %v757, %v753
    %v934 = vpack.c.b16 %v762, %v758
    %v935 = vpack.c.b16 %v763, %v759
    %v936 = vpack.c.b16 %v764, %v760
    %v937 = vpack.c.b16 %v765, %v761
    %v938 = vpack.c.b16 %v770, %v766
    %v939 = vpack.c.b16 %v771, %v767
    %v940 = vpack.c.b16 %v772, %v768
    %v941 = vpack.c.b16 %v773, %v769
    %v942 = vpack.c.b16 %v778, %v774
    %v943 = vpack.c.b16 %v779, %v775
    %v944 = vpack.c.b16 %v780, %v776
    %v945 = vpack.c.b16 %v781, %v777
    %v946 = vpack.c.b16 %v786, %v782
    %v947 = vpack.c.b16 %v787, %v783
    %v948 = vpack.c.b16 %v788, %v784
    %v949 = vpack.c.b16 %v789, %v785
    %v950 = vpack.c.b16 %v794, %v790
    %v951 = vpack.c.b16 %v795, %v791
    %v952 = vpack.c.b16 %v796, %v792
    %v953 = vpack.c.b16 %v797, %v793
    %v954 = vpack.c.b16 %v802, %v798
    %v955 = vpack.c.b16 %v803, %v799
    %v956 = vpack.c.b16 %v804, %v800
    %v957 = vpack.c.b16 %v805, %v801
    %v958 = vpack.c.b16 %v810, %v806
    %v959 = vpack.c.b16 %v811, %v807
    %v960 = vpack.c.b16 %v812, %v808
    %v961 = vpack.c.b16 %v813, %v809
    %v962 = vpack.c.b16 %v818, %v814
    %v963 = vpack.c.b16 %v819, %v815
    %v964 = vpack.c.b16 %v820, %v816
    %v965 = vpack.c.b16 %v821, %v817
    %v966 = vpack.c.b16 %v826, %v822
    %v967 = vpack.c.b16 %v827, %v823
    %v968 = vpack.c.b16 %v828, %v824
    %v969 = vpack.c.b16 %v829, %v825
    %v970 = vpack.c.b16 %v834, %v830
    %v971 = vpack.c.b16 %v835, %v831
    %v972 = vpack.c.b16 %v836, %v832
    %v973 = vpack.c.b16 %v837, %v833
    %v974 = vpack.c.b16 %v842, %v838
    %v975 = vpack.c.b16 %v843, %v839
    %v976 = vpack.c.b16 %v844, %v840
    %v977 = vpack.c.b16 %v845, %v841
    %v978 = vpack.c.b16 %v850, %v846
    %v979 = vpack.c.b16 %v851, %v847
    %v980 = vpack.c.b16 %v852, %v848
    %v981 = vpack.c.b16 %v853, %v849
    %1110 = vmatpush.bf16.msra.mxu0 %v882
    %1111 = vmatpush.bf16.msra.mxu0 %v878
    %1112 = vmatpush.bf16.msra.mxu0 %v874
    %1113 = vmatpush.bf16.msra.mxu0 %v870
    %1114 = vmatpush.bf16.msra.mxu0 %v866
    %1115 = vmatpush.bf16.msra.mxu0 %v862
    %1116 = vmatpush.bf16.msra.mxu0 %v858
    %1117 = vmatpush.bf16.msra.mxu0 %v854
    %1118 = vmatmul.bf16.gmra.mxu0 %v328
    %v1119 = vpop.f32.mrf.mxu0
    %v1120 = vadd.f32 %v462, %v1119
    %v1121 = vpop.f32.mrf.mxu0
    %1122 = vdwg.mxu0
    %1123 = vmatpush.bf16.msra.mxu0 %v914
    %1124 = vmatpush.bf16.msra.mxu0 %v910
    %1125 = vmatpush.bf16.msra.mxu0 %v906
    %1126 = vmatpush.bf16.msra.mxu0 %v902
    %1127 = vmatpush.bf16.msra.mxu0 %v898
    %1128 = vmatpush.bf16.msra.mxu0 %v894
    %1129 = vmatpush.bf16.msra.mxu0 %v890
    %1130 = vmatpush.bf16.msra.mxu0 %v886
    %1131 = vmatmul.bf16.gmra.mxu0 %v329
    %v1132 = vpop.f32.mrf.mxu0
    %v1133 = vadd.f32 %v1120, %v1132
    %v1134 = vpop.f32.mrf.mxu0
    %1135 = vdwg.mxu0
    %1136 = vmatpush.bf16.msra.mxu0 %v946
    %1137 = vmatpush.bf16.msra.mxu0 %v942
    %1138 = vmatpush.bf16.msra.mxu0 %v938
    %1139 = vmatpush.bf16.msra.mxu0 %v934
    %1140 = vmatpush.bf16.msra.mxu0 %v930
    %1141 = vmatpush.bf16.msra.mxu0 %v926
    %1142 = vmatpush.bf16.msra.mxu0 %v922
    %1143 = vmatpush.bf16.msra.mxu0 %v918
    %1144 = vmatmul.bf16.gmra.mxu0 %v330
    %v1145 = vpop.f32.mrf.mxu0
    %v1146 = vadd.f32 %v1133, %v1145
    %v1147 = vpop.f32.mrf.mxu0
    %1148 = vdwg.mxu0
    %1149 = vmatpush.bf16.msra.mxu0 %v978
    %1150 = vmatpush.bf16.msra.mxu0 %v974
    %1151 = vmatpush.bf16.msra.mxu0 %v970
    %1152 = vmatpush.bf16.msra.mxu0 %v966
    %1153 = vmatpush.bf16.msra.mxu0 %v962
    %1154 = vmatpush.bf16.msra.mxu0 %v958
    %1155 = vmatpush.bf16.msra.mxu0 %v954
    %1156 = vmatpush.bf16.msra.mxu0 %v950
    %1157 = vmatmul.bf16.gmra.mxu0 %v331
    %v1158 = vpop.f32.mrf.mxu0
    %v1159 = vadd.f32 %v1146, %v1158
    %v1160 = vpop.f32.mrf.mxu0
    %1161 = vdwg.mxu0
    %1162 = vmatpush.bf16.msra.mxu0 %v883
    %1163 = vmatpush.bf16.msra.mxu0 %v879
    %1164 = vmatpush.bf16.msra.mxu0 %v875
    %1165 = vmatpush.bf16.msra.mxu0 %v871
    %1166 = vmatpush.bf16.msra.mxu0 %v867
    %1167 = vmatpush.bf16.msra.mxu0 %v863
    %1168 = vmatpush.bf16.msra.mxu0 %v859
    %1169 = vmatpush.bf16.msra.mxu0 %v855
    %1170 = vmatmul.bf16.gmra.mxu0 %v328
    %v1171 = vpop.f32.mrf.mxu0
    %v1172 = vadd.f32 %v463, %v1171
    %v1173 = vpop.f32.mrf.mxu0
    %1174 = vdwg.mxu0
    %1175 = vmatpush.bf16.msra.mxu0 %v915
    %1176 = vmatpush.bf16.msra.mxu0 %v911
    %1177 = vmatpush.bf16.msra.mxu0 %v907
    %1178 = vmatpush.bf16.msra.mxu0 %v903
    %1179 = vmatpush.bf16.msra.mxu0 %v899
    %1180 = vmatpush.bf16.msra.mxu0 %v895
    %1181 = vmatpush.bf16.msra.mxu0 %v891
    %1182 = vmatpush.bf16.msra.mxu0 %v887
    %1183 = vmatmul.bf16.gmra.mxu0 %v329
    %v1184 = vpop.f32.mrf.mxu0
    %v1185 = vadd.f32 %v1172, %v1184
    %v1186 = vpop.f32.mrf.mxu0
    %1187 = vdwg.mxu0
    %1188 = vmatpush.bf16.msra.mxu0 %v947
    %1189 = vmatpush.bf16.msra.mxu0 %v943
    %1190 = vmatpush.bf16.msra.mxu0 %v939
    %1191 = vmatpush.bf16.msra.mxu0 %v935
    %1192 = vmatpush.bf16.msra.mxu0 %v931
    %1193 = vmatpush.bf16.msra.mxu0 %v927
    %1194 = vmatpush.bf16.msra.mxu0 %v923
    %1195 = vmatpush.bf16.msra.mxu0 %v919
    %1196 = vmatmul.bf16.gmra.mxu0 %v330
    %v1197 = vpop.f32.mrf.mxu0
    %v1198 = vadd.f32 %v1185, %v1197
    %v1199 = vpop.f32.mrf.mxu0
    %1200 = vdwg.mxu0
    %1201 = vmatpush.bf16.msra.mxu0 %v979
    %1202 = vmatpush.bf16.msra.mxu0 %v975
    %1203 = vmatpush.bf16.msra.mxu0 %v971
    %1204 = vmatpush.bf16.msra.mxu0 %v967
    %1205 = vmatpush.bf16.msra.mxu0 %v963
    %1206 = vmatpush.bf16.msra.mxu0 %v959
    %1207 = vmatpush.bf16.msra.mxu0 %v955
    %1208 = vmatpush.bf16.msra.mxu0 %v951
    %1209 = vmatmul.bf16.gmra.mxu0 %v331
    %v1210 = vpop.f32.mrf.mxu0
    %v1211 = vadd.f32 %v1198, %v1210
    %v1212 = vpop.f32.mrf.mxu0
    %1213 = vdwg.mxu0
    %1214 = vmatpush.bf16.msra.mxu0 %v884
    %1215 = vmatpush.bf16.msra.mxu0 %v880
    %1216 = vmatpush.bf16.msra.mxu0 %v876
    %1217 = vmatpush.bf16.msra.mxu0 %v872
    %1218 = vmatpush.bf16.msra.mxu0 %v868
    %1219 = vmatpush.bf16.msra.mxu0 %v864
    %1220 = vmatpush.bf16.msra.mxu0 %v860
    %1221 = vmatpush.bf16.msra.mxu0 %v856
    %1222 = vmatmul.bf16.gmra.mxu0 %v328
    %v1223 = vpop.f32.mrf.mxu0
    %v1224 = vadd.f32 %v464, %v1223
    %v1225 = vpop.f32.mrf.mxu0
    %1226 = vdwg.mxu0
    %1227 = vmatpush.bf16.msra.mxu0 %v916
    %1228 = vmatpush.bf16.msra.mxu0 %v912
    %1229 = vmatpush.bf16.msra.mxu0 %v908
    %1230 = vmatpush.bf16.msra.mxu0 %v904
    %1231 = vmatpush.bf16.msra.mxu0 %v900
    %1232 = vmatpush.bf16.msra.mxu0 %v896
    %1233 = vmatpush.bf16.msra.mxu0 %v892
    %1234 = vmatpush.bf16.msra.mxu0 %v888
    %1235 = vmatmul.bf16.gmra.mxu0 %v329
    %v1236 = vpop.f32.mrf.mxu0
    %v1237 = vadd.f32 %v1224, %v1236
    %v1238 = vpop.f32.mrf.mxu0
    %1239 = vdwg.mxu0
    %1240 = vmatpush.bf16.msra.mxu0 %v948
    %1241 = vmatpush.bf16.msra.mxu0 %v944
    %1242 = vmatpush.bf16.msra.mxu0 %v940
    %1243 = vmatpush.bf16.msra.mxu0 %v936
    %1244 = vmatpush.bf16.msra.mxu0 %v932
    %1245 = vmatpush.bf16.msra.mxu0 %v928
    %1246 = vmatpush.bf16.msra.mxu0 %v924
    %1247 = vmatpush.bf16.msra.mxu0 %v920
    %1248 = vmatmul.bf16.gmra.mxu0 %v330
    %v1249 = vpop.f32.mrf.mxu0
    %v1250 = vadd.f32 %v1237, %v1249
    %v1251 = vpop.f32.mrf.mxu0
    %1252 = vdwg.mxu0
    %1253 = vmatpush.bf16.msra.mxu0 %v980
    %1254 = vmatpush.bf16.msra.mxu0 %v976
    %1255 = vmatpush.bf16.msra.mxu0 %v972
    %1256 = vmatpush.bf16.msra.mxu0 %v968
    %1257 = vmatpush.bf16.msra.mxu0 %v964
    %1258 = vmatpush.bf16.msra.mxu0 %v960
    %1259 = vmatpush.bf16.msra.mxu0 %v956
    %1260 = vmatpush.bf16.msra.mxu0 %v952
    %1261 = vmatmul.bf16.gmra.mxu0 %v331
    %v1262 = vpop.f32.mrf.mxu0
    %v1263 = vadd.f32 %v1250, %v1262
    %v1264 = vpop.f32.mrf.mxu0
    %1265 = vdwg.mxu0
    %1266 = vmatpush.bf16.msra.mxu0 %v885
    %1267 = vmatpush.bf16.msra.mxu0 %v881
    %1268 = vmatpush.bf16.msra.mxu0 %v877
    %1269 = vmatpush.bf16.msra.mxu0 %v873
    %1270 = vmatpush.bf16.msra.mxu0 %v869
    %1271 = vmatpush.bf16.msra.mxu0 %v865
    %1272 = vmatpush.bf16.msra.mxu0 %v861
    %1273 = vmatpush.bf16.msra.mxu0 %v857
    %1274 = vmatmul.bf16.gmra.mxu0 %v328
    %v1275 = vpop.f32.mrf.mxu0
    %v1276 = vadd.f32 %v465, %v1275
    %v1277 = vpop.f32.mrf.mxu0
    %1278 = vdwg.mxu0
    %1279 = vmatpush.bf16.msra.mxu0 %v917
    %1280 = vmatpush.bf16.msra.mxu0 %v913
    %1281 = vmatpush.bf16.msra.mxu0 %v909
    %1282 = vmatpush.bf16.msra.mxu0 %v905
    %1283 = vmatpush.bf16.msra.mxu0 %v901
    %1284 = vmatpush.bf16.msra.mxu0 %v897
    %1285 = vmatpush.bf16.msra.mxu0 %v893
    %1286 = vmatpush.bf16.msra.mxu0 %v889
    %1287 = vmatmul.bf16.gmra.mxu0 %v329
    %v1288 = vpop.f32.mrf.mxu0
    %v1289 = vadd.f32 %v1276, %v1288
    %v1290 = vpop.f32.mrf.mxu0
    %1291 = vdwg.mxu0
    %1292 = vmatpush.bf16.msra.mxu0 %v949
    %1293 = vmatpush.bf16.msra.mxu0 %v945
    %1294 = vmatpush.bf16.msra.mxu0 %v941
    %1295 = vmatpush.bf16.msra.mxu0 %v937
    %1296 = vmatpush.bf16.msra.mxu0 %v933
    %1297 = vmatpush.bf16.msra.mxu0 %v929
    %1298 = vmatpush.bf16.msra.mxu0 %v925
    %1299 = vmatpush.bf16.msra.mxu0 %v921
    %1300 = vmatmul.bf16.gmra.mxu0 %v330
    %v1301 = vpop.f32.mrf.mxu0
    %v1302 = vadd.f32 %v1289, %v1301
    %v1303 = vpop.f32.mrf.mxu0
    %1304 = vdwg.mxu0
    %1305 = vmatpush.bf16.msra.mxu0 %v981
    %1306 = vmatpush.bf16.msra.mxu0 %v977
    %1307 = vmatpush.bf16.msra.mxu0 %v973
    %1308 = vmatpush.bf16.msra.mxu0 %v969
    %1309 = vmatpush.bf16.msra.mxu0 %v965
    %1310 = vmatpush.bf16.msra.mxu0 %v961
    %1311 = vmatpush.bf16.msra.mxu0 %v957
    %1312 = vmatpush.bf16.msra.mxu0 %v953
    %1313 = vmatmul.bf16.gmra.mxu0 %v331
    %v1314 = vpop.f32.mrf.mxu0
    %v1315 = vadd.f32 %v1302, %v1314
    %v1316 = vpop.f32.mrf.mxu0
    %1317 = vdwg.mxu0
    %v1318 = vadd.f32 %v1159, %v282
    %v1319 = vadd.f32 %v1211, %v295
    %v1320 = vadd.f32 %v1263, %v308
    %v1321 = vadd.f32 %v1315, %v321
    %v1322 = vmax.f32 %v1318, 0.0
    %v1323 = vmax.f32 %v1319, 0.0
    %v1324 = vmax.f32 %v1320, 0.0
    %v1325 = vmax.f32 %v1321, 0.0
    %v1326 = vpack.c.bf16 %v1322, %v1322
    %v1327 = vpack.c.bf16 %v1323, %v1323
    %v1328 = vpack.c.bf16 %v1324, %v1324
    %v1329 = vpack.c.bf16 %v1325, %v1325
    %v1330 = vld [vmem:[#allocation8] sm:$0xff]
    %v1331 = vld [vmem:[#allocation8 + $0x8] sm:$0xff]
    %v1332 = vld [vmem:[#allocation8 + $0x10] sm:$0xf]
    %v1333 = vld [vmem:[#allocation8 + $0x14] sm:$0xff]
    %v1334 = vld [vmem:[#allocation8 + $0x1c] sm:$0xff]
    %v1335 = vld [vmem:[#allocation8 + $0x24] sm:$0xf]
    %v1336 = vld [vmem:[#allocation8 + $0x28] sm:$0xff]
    %v1337 = vld [vmem:[#allocation8 + $0x30] sm:$0xff]
    %v1338 = vld [vmem:[#allocation8 + $0x38] sm:$0xf]
    %v1339 = vld [vmem:[#allocation8 + $0x3c] sm:$0xff]
    %v1340 = vld [vmem:[#allocation8 + $0x44] sm:$0xff]
    %v1341 = vld [vmem:[#allocation8 + $0x4c] sm:$0xf]
    %v1342 = vld [vmem:[#allocation8 + $0x50] sm:$0xff]
    %v1343 = vld [vmem:[#allocation8 + $0x58] sm:$0xff]
    %v1344 = vld [vmem:[#allocation8 + $0x60] sm:$0xf]
    %v1345 = vld [vmem:[#allocation8 + $0x64] sm:$0xff]
    %v1346 = vld [vmem:[#allocation8 + $0x6c] sm:$0xff]
    %v1347 = vld [vmem:[#allocation8 + $0x74] sm:$0xf]
    %v1348 = vld [vmem:[#allocation8 + $0x78] sm:$0xff]
    %v1349 = vld [vmem:[#allocation8 + $0x80] sm:$0xff]
    %v1350 = vld [vmem:[#allocation8 + $0x88] sm:$0xf]
    %v1351 = vld [vmem:[#allocation8 + $0x8c] sm:$0xff]
    %v1352 = vld [vmem:[#allocation8 + $0x94] sm:$0xff]
    %v1353 = vld [vmem:[#allocation8 + $0x9c] sm:$0xf]
    %v1354 = vld [vmem:[#allocation8 + $0xa0] sm:$0xff]
    %v1355 = vld [vmem:[#allocation8 + $0xa8] sm:$0xff]
    %v1356 = vld [vmem:[#allocation8 + $0xb0] sm:$0xf]
    %v1357 = vld [vmem:[#allocation8 + $0xb4] sm:$0xff]
    %v1358 = vld [vmem:[#allocation8 + $0xbc] sm:$0xff]
    %v1359 = vld [vmem:[#allocation8 + $0xc4] sm:$0xf]
    %v1360 = vld [vmem:[#allocation8 + $0xc8] sm:$0xff]
    %v1361 = vld [vmem:[#allocation8 + $0xd0] sm:$0xff]
    %v1362 = vld [vmem:[#allocation8 + $0xd8] sm:$0xf]
    %v1363 = vld [vmem:[#allocation8 + $0xdc] sm:$0xff]
    %v1364 = vld [vmem:[#allocation8 + $0xe4] sm:$0xff]
    %v1365 = vld [vmem:[#allocation8 + $0xec] sm:$0xf]
    %v1366 = vld [vmem:[#allocation8 + $0xf0] sm:$0xff]
    %v1367 = vld [vmem:[#allocation8 + $0xf8] sm:$0xff]
    %v1368 = vld [vmem:[#allocation8 + $0x100] sm:$0xf]
    %v1369 = vld [vmem:[#allocation8 + $0x104] sm:$0xff]
    %v1370 = vld [vmem:[#allocation8 + $0x10c] sm:$0xff]
    %v1371 = vld [vmem:[#allocation8 + $0x114] sm:$0xf]
    %v1372 = vld [vmem:[#allocation8 + $0x118] sm:$0xff]
    %v1373 = vld [vmem:[#allocation8 + $0x120] sm:$0xff]
    %v1374 = vld [vmem:[#allocation8 + $0x128] sm:$0xf]
    %v1375 = vld [vmem:[#allocation8 + $0x12c] sm:$0xff]
    %v1376 = vld [vmem:[#allocation8 + $0x134] sm:$0xff]
    %v1377 = vld [vmem:[#allocation8 + $0x13c] sm:$0xf]
    %v1378 = vld [vmem:[#allocation8 + $0x140] sm:$0xff]
    %v1379 = vld [vmem:[#allocation8 + $0x148] sm:$0xff]
    %v1380 = vld [vmem:[#allocation8 + $0x150] sm:$0xf]
    %v1381 = vld [vmem:[#allocation8 + $0x154] sm:$0xff]
    %v1382 = vld [vmem:[#allocation8 + $0x15c] sm:$0xff]
    %v1383 = vld [vmem:[#allocation8 + $0x164] sm:$0xf]
    %v1384 = vld [vmem:[#allocation8 + $0x168] sm:$0xff]
    %v1385 = vld [vmem:[#allocation8 + $0x170] sm:$0xff]
    %v1386 = vld [vmem:[#allocation8 + $0x178] sm:$0xf]
    %v1387 = vld [vmem:[#allocation8 + $0x17c] sm:$0xff]
    %v1388 = vld [vmem:[#allocation8 + $0x184] sm:$0xff]
    %v1389 = vld [vmem:[#allocation8 + $0x18c] sm:$0xf]
    %v1390 = vld [vmem:[#allocation8 + $0x190] sm:$0xff]
    %v1391 = vld [vmem:[#allocation8 + $0x198] sm:$0xff]
    %v1392 = vld [vmem:[#allocation8 + $0x1a0] sm:$0xf]
    %v1393 = vld [vmem:[#allocation8 + $0x1a4] sm:$0xff]
    %v1394 = vld [vmem:[#allocation8 + $0x1ac] sm:$0xff]
    %v1395 = vld [vmem:[#allocation8 + $0x1b4] sm:$0xf]
    %v1396 = vld [vmem:[#allocation8 + $0x1b8] sm:$0xff]
    %v1397 = vld [vmem:[#allocation8 + $0x1c0] sm:$0xff]
    %v1398 = vld [vmem:[#allocation8 + $0x1c8] sm:$0xf]
    %v1399 = vld [vmem:[#allocation8 + $0x1cc] sm:$0xff]
    %v1400 = vld [vmem:[#allocation8 + $0x1d4] sm:$0xff]
    %v1401 = vld [vmem:[#allocation8 + $0x1dc] sm:$0xf]
    %v1402 = vld [vmem:[#allocation8 + $0x1e0] sm:$0xff]
    %v1403 = vld [vmem:[#allocation8 + $0x1e8] sm:$0xff]
    %v1404 = vld [vmem:[#allocation8 + $0x1f0] sm:$0xf]
    %v1405 = vld [vmem:[#allocation8 + $0x1f4] sm:$0xff]
    %v1406 = vld [vmem:[#allocation8 + $0x1fc] sm:$0xff]
    %v1407 = vld [vmem:[#allocation8 + $0x204] sm:$0xf]
    %v1408 = vld [vmem:[#allocation8 + $0x208] sm:$0xff]
    %v1409 = vld [vmem:[#allocation8 + $0x210] sm:$0xff]
    %v1410 = vld [vmem:[#allocation8 + $0x218] sm:$0xf]
    %v1411 = vld [vmem:[#allocation8 + $0x21c] sm:$0xff]
    %v1412 = vld [vmem:[#allocation8 + $0x224] sm:$0xff]
    %v1413 = vld [vmem:[#allocation8 + $0x22c] sm:$0xf]
    %v1414 = vld [vmem:[#allocation8 + $0x230] sm:$0xff]
    %v1415 = vld [vmem:[#allocation8 + $0x238] sm:$0xff]
    %v1416 = vld [vmem:[#allocation8 + $0x240] sm:$0xf]
    %v1417 = vld [vmem:[#allocation8 + $0x244] sm:$0xff]
    %v1418 = vld [vmem:[#allocation8 + $0x24c] sm:$0xff]
    %v1419 = vld [vmem:[#allocation8 + $0x254] sm:$0xf]
    %v1420 = vld [vmem:[#allocation8 + $0x258] sm:$0xff]
    %v1421 = vld [vmem:[#allocation8 + $0x260] sm:$0xff]
    %v1422 = vld [vmem:[#allocation8 + $0x268] sm:$0xf]
    %v1423 = vld [vmem:[#allocation8 + $0x26c] sm:$0xff]
    %v1424 = vld [vmem:[#allocation8 + $0x274] sm:$0xff]
    %v1425 = vld [vmem:[#allocation8 + $0x27c] sm:$0xf]
    %v1426 = vld [vmem:[#allocation8 + $0x280] sm:$0xff]
    %v1427 = vld [vmem:[#allocation8 + $0x288] sm:$0xff]
    %v1428 = vld [vmem:[#allocation8 + $0x290] sm:$0xf]
    %v1429 = vld [vmem:[#allocation8 + $0x294] sm:$0xff]
    %v1430 = vld [vmem:[#allocation8 + $0x29c] sm:$0xff]
    %v1431 = vld [vmem:[#allocation8 + $0x2a4] sm:$0xf]
    %v1432 = vld [vmem:[#allocation8 + $0x2a8] sm:$0xff]
    %v1433 = vld [vmem:[#allocation8 + $0x2b0] sm:$0xff]
    %v1434 = vld [vmem:[#allocation8 + $0x2b8] sm:$0xf]
    %v1435 = vld [vmem:[#allocation8 + $0x2bc] sm:$0xff]
    %v1436 = vld [vmem:[#allocation8 + $0x2c4] sm:$0xff]
    %v1437 = vld [vmem:[#allocation8 + $0x2cc] sm:$0xf]
    %v1438 = vld [vmem:[#allocation8 + $0x2d0] sm:$0xff]
    %v1439 = vld [vmem:[#allocation8 + $0x2d8] sm:$0xff]
    %v1440 = vld [vmem:[#allocation8 + $0x2e0] sm:$0xf]
    %v1441 = vld [vmem:[#allocation8 + $0x2e4] sm:$0xff]
    %v1442 = vld [vmem:[#allocation8 + $0x2ec] sm:$0xff]
    %v1443 = vld [vmem:[#allocation8 + $0x2f4] sm:$0xf]
    %v1444 = vld [vmem:[#allocation8 + $0x2f8] sm:$0xff]
    %v1445 = vld [vmem:[#allocation8 + $0x300] sm:$0xff]
    %v1446 = vld [vmem:[#allocation8 + $0x308] sm:$0xf]
    %v1447 = vld [vmem:[#allocation8 + $0x30c] sm:$0xff]
    %v1448 = vld [vmem:[#allocation8 + $0x314] sm:$0xff]
    %v1449 = vld [vmem:[#allocation8 + $0x31c] sm:$0xf]
    %v1450 = vld [vmem:[#allocation8 + $0x320] sm:$0xff]
    %v1451 = vld [vmem:[#allocation8 + $0x328] sm:$0xff]
    %v1452 = vld [vmem:[#allocation8 + $0x330] sm:$0xf]
    %v1453 = vld [vmem:[#allocation8 + $0x334] sm:$0xff]
    %v1454 = vld [vmem:[#allocation8 + $0x33c] sm:$0xff]
    %v1455 = vld [vmem:[#allocation8 + $0x344] sm:$0xf]
    %v1456 = vld [vmem:[#allocation8 + $0x348] sm:$0xff]
    %v1457 = vld [vmem:[#allocation8 + $0x350] sm:$0xff]
    %v1458 = vld [vmem:[#allocation8 + $0x358] sm:$0xf]
    %v1459 = vld [vmem:[#allocation8 + $0x35c] sm:$0xff]
    %v1460 = vld [vmem:[#allocation8 + $0x364] sm:$0xff]
    %v1461 = vld [vmem:[#allocation8 + $0x36c] sm:$0xf]
    %v1462 = vld [vmem:[#allocation8 + $0x370] sm:$0xff]
    %v1463 = vld [vmem:[#allocation8 + $0x378] sm:$0xff]
    %v1464 = vld [vmem:[#allocation8 + $0x380] sm:$0xf]
    %v1465 = vld [vmem:[#allocation8 + $0x384] sm:$0xff]
    %v1466 = vld [vmem:[#allocation8 + $0x38c] sm:$0xff]
    %v1467 = vld [vmem:[#allocation8 + $0x394] sm:$0xf]
    %v1468 = vld [vmem:[#allocation8 + $0x398] sm:$0xff]
    %v1469 = vld [vmem:[#allocation8 + $0x3a0] sm:$0xff]
    %v1470 = vld [vmem:[#allocation8 + $0x3a8] sm:$0xf]
    %v1471 = vld [vmem:[#allocation8 + $0x3ac] sm:$0xff]
    %v1472 = vld [vmem:[#allocation8 + $0x3b4] sm:$0xff]
    %v1473 = vld [vmem:[#allocation8 + $0x3bc] sm:$0xf]
    %v1474 = vld [vmem:[#allocation8 + $0x3c0] sm:$0xff]
    %v1475 = vld [vmem:[#allocation8 + $0x3c8] sm:$0xff]
    %v1476 = vld [vmem:[#allocation8 + $0x3d0] sm:$0xf]
    %v1477 = vld [vmem:[#allocation8 + $0x3d4] sm:$0xff]
    %v1478 = vld [vmem:[#allocation8 + $0x3dc] sm:$0xff]
    %v1479 = vld [vmem:[#allocation8 + $0x3e4] sm:$0xf]
    %v1480 = vld [vmem:[#allocation8 + $0x3e8] sm:$0xff]
    %v1481 = vld [vmem:[#allocation8 + $0x3f0] sm:$0xff]
    %v1482 = vld [vmem:[#allocation8 + $0x3f8] sm:$0xf]
    %v1483 = vld [vmem:[#allocation8 + $0x3fc] sm:$0xff]
    %v1484 = vld [vmem:[#allocation8 + $0x404] sm:$0xff]
    %v1485 = vld [vmem:[#allocation8 + $0x40c] sm:$0xf]
    %v1486 = vld [vmem:[#allocation8 + $0x410] sm:$0xff]
    %v1487 = vld [vmem:[#allocation8 + $0x418] sm:$0xff]
    %v1488 = vld [vmem:[#allocation8 + $0x420] sm:$0xf]
    %v1489 = vld [vmem:[#allocation8 + $0x424] sm:$0xff]
    %v1490 = vld [vmem:[#allocation8 + $0x42c] sm:$0xff]
    %v1491 = vld [vmem:[#allocation8 + $0x434] sm:$0xf]
    %v1492 = vld [vmem:[#allocation8 + $0x438] sm:$0xff]
    %v1493 = vld [vmem:[#allocation8 + $0x440] sm:$0xff]
    %v1494 = vld [vmem:[#allocation8 + $0x448] sm:$0xf]
    %v1495 = vld [vmem:[#allocation8 + $0x44c] sm:$0xff]
    %v1496 = vld [vmem:[#allocation8 + $0x454] sm:$0xff]
    %v1497 = vld [vmem:[#allocation8 + $0x45c] sm:$0xf]
    %v1498 = vld [vmem:[#allocation8 + $0x460] sm:$0xff]
    %v1499 = vld [vmem:[#allocation8 + $0x468] sm:$0xff]
    %v1500 = vld [vmem:[#allocation8 + $0x470] sm:$0xf]
    %v1501 = vld [vmem:[#allocation8 + $0x474] sm:$0xff]
    %v1502 = vld [vmem:[#allocation8 + $0x47c] sm:$0xff]
    %v1503 = vld [vmem:[#allocation8 + $0x484] sm:$0xf]
    %v1504 = vld [vmem:[#allocation8 + $0x488] sm:$0xff]
    %v1505 = vld [vmem:[#allocation8 + $0x490] sm:$0xff]
    %v1506 = vld [vmem:[#allocation8 + $0x498] sm:$0xf]
    %v1507 = vld [vmem:[#allocation8 + $0x49c] sm:$0xff]
    %v1508 = vld [vmem:[#allocation8 + $0x4a4] sm:$0xff]
    %v1509 = vld [vmem:[#allocation8 + $0x4ac] sm:$0xf]
    %v1510 = vld [vmem:[#allocation8 + $0x4b0] sm:$0xff]
    %v1511 = vld [vmem:[#allocation8 + $0x4b8] sm:$0xff]
    %v1512 = vld [vmem:[#allocation8 + $0x4c0] sm:$0xf]
    %v1513 = vld [vmem:[#allocation8 + $0x4c4] sm:$0xff]
    %v1514 = vld [vmem:[#allocation8 + $0x4cc] sm:$0xff]
    %v1515 = vld [vmem:[#allocation8 + $0x4d4] sm:$0xf]
    %v1516 = vld [vmem:[#allocation8 + $0x4d8] sm:$0xff]
    %v1517 = vld [vmem:[#allocation8 + $0x4e0] sm:$0xff]
    %v1518 = vld [vmem:[#allocation8 + $0x4e8] sm:$0xf]
    %v1519 = vld [vmem:[#allocation8 + $0x4ec] sm:$0xff]
    %v1520 = vld [vmem:[#allocation8 + $0x4f4] sm:$0xff]
    %v1521 = vld [vmem:[#allocation8 + $0x4fc] sm:$0xf]
    %v1522 = vld [vmem:[#allocation11 + $0x4] sm:$0x1f]
    %v1524 = vperm.slane %v1522, 0
    %v1525 = vperm.slane %v1522, 1
    %v1526 = vperm.slane %v1522, 2
    %v1527 = vperm.slane %v1522, 3
    %v1528 = vperm.slane %v1522, 4
    %v1726 = vunpack.c.l.b16 %v1330
    %v1727 = vunpack.c.h.b16 %v1330
    %v1728 = vunpack.c.l.b16 %v1331
    %v1729 = vunpack.c.h.b16 %v1331
    %v1730 = vunpack.c.l.b16 %v1332
    %v1731 = vunpack.c.l.b16 %v1333
    %v1732 = vunpack.c.h.b16 %v1333
    %v1733 = vunpack.c.l.b16 %v1334
    %v1734 = vunpack.c.h.b16 %v1334
    %v1735 = vunpack.c.l.b16 %v1335
    %v1736 = vunpack.c.l.b16 %v1336
    %v1737 = vunpack.c.h.b16 %v1336
    %v1738 = vunpack.c.l.b16 %v1337
    %v1739 = vunpack.c.h.b16 %v1337
    %v1740 = vunpack.c.l.b16 %v1338
    %v1741 = vunpack.c.l.b16 %v1339
    %v1742 = vunpack.c.h.b16 %v1339
    %v1743 = vunpack.c.l.b16 %v1340
    %v1744 = vunpack.c.h.b16 %v1340
    %v1745 = vunpack.c.l.b16 %v1341
    %v1746 = vunpack.c.l.b16 %v1342
    %v1747 = vunpack.c.h.b16 %v1342
    %v1748 = vunpack.c.l.b16 %v1343
    %v1749 = vunpack.c.h.b16 %v1343
    %v1750 = vunpack.c.l.b16 %v1344
    %v1751 = vunpack.c.l.b16 %v1345
    %v1752 = vunpack.c.h.b16 %v1345
    %v1753 = vunpack.c.l.b16 %v1346
    %v1754 = vunpack.c.h.b16 %v1346
    %v1755 = vunpack.c.l.b16 %v1347
    %v1756 = vunpack.c.l.b16 %v1348
    %v1757 = vunpack.c.h.b16 %v1348
    %v1758 = vunpack.c.l.b16 %v1349
    %v1759 = vunpack.c.h.b16 %v1349
    %v1760 = vunpack.c.l.b16 %v1350
    %v1761 = vunpack.c.l.b16 %v1351
    %v1762 = vunpack.c.h.b16 %v1351
    %v1763 = vunpack.c.l.b16 %v1352
    %v1764 = vunpack.c.h.b16 %v1352
    %v1765 = vunpack.c.l.b16 %v1353
    %v1766 = vunpack.c.l.b16 %v1354
    %v1767 = vunpack.c.h.b16 %v1354
    %v1768 = vunpack.c.l.b16 %v1355
    %v1769 = vunpack.c.h.b16 %v1355
    %v1770 = vunpack.c.l.b16 %v1356
    %v1771 = vunpack.c.l.b16 %v1357
    %v1772 = vunpack.c.h.b16 %v1357
    %v1773 = vunpack.c.l.b16 %v1358
    %v1774 = vunpack.c.h.b16 %v1358
    %v1775 = vunpack.c.l.b16 %v1359
    %v1776 = vunpack.c.l.b16 %v1360
    %v1777 = vunpack.c.h.b16 %v1360
    %v1778 = vunpack.c.l.b16 %v1361
    %v1779 = vunpack.c.h.b16 %v1361
    %v1780 = vunpack.c.l.b16 %v1362
    %v1781 = vunpack.c.l.b16 %v1363
    %v1782 = vunpack.c.h.b16 %v1363
    %v1783 = vunpack.c.l.b16 %v1364
    %v1784 = vunpack.c.h.b16 %v1364
    %v1785 = vunpack.c.l.b16 %v1365
    %v1786 = vunpack.c.l.b16 %v1366
    %v1787 = vunpack.c.h.b16 %v1366
    %v1788 = vunpack.c.l.b16 %v1367
    %v1789 = vunpack.c.h.b16 %v1367
    %v1790 = vunpack.c.l.b16 %v1368
    %v1791 = vunpack.c.l.b16 %v1369
    %v1792 = vunpack.c.h.b16 %v1369
    %v1793 = vunpack.c.l.b16 %v1370
    %v1794 = vunpack.c.h.b16 %v1370
    %v1795 = vunpack.c.l.b16 %v1371
    %v1796 = vunpack.c.l.b16 %v1372
    %v1797 = vunpack.c.h.b16 %v1372
    %v1798 = vunpack.c.l.b16 %v1373
    %v1799 = vunpack.c.h.b16 %v1373
    %v1800 = vunpack.c.l.b16 %v1374
    %v1801 = vunpack.c.l.b16 %v1375
    %v1802 = vunpack.c.h.b16 %v1375
    %v1803 = vunpack.c.l.b16 %v1376
    %v1804 = vunpack.c.h.b16 %v1376
    %v1805 = vunpack.c.l.b16 %v1377
    %v1806 = vunpack.c.l.b16 %v1378
    %v1807 = vunpack.c.h.b16 %v1378
    %v1808 = vunpack.c.l.b16 %v1379
    %v1809 = vunpack.c.h.b16 %v1379
    %v1810 = vunpack.c.l.b16 %v1380
    %v1811 = vunpack.c.l.b16 %v1381
    %v1812 = vunpack.c.h.b16 %v1381
    %v1813 = vunpack.c.l.b16 %v1382
    %v1814 = vunpack.c.h.b16 %v1382
    %v1815 = vunpack.c.l.b16 %v1383
    %v1816 = vunpack.c.l.b16 %v1384
    %v1817 = vunpack.c.h.b16 %v1384
    %v1818 = vunpack.c.l.b16 %v1385
    %v1819 = vunpack.c.h.b16 %v1385
    %v1820 = vunpack.c.l.b16 %v1386
    %v1821 = vunpack.c.l.b16 %v1387
    %v1822 = vunpack.c.h.b16 %v1387
    %v1823 = vunpack.c.l.b16 %v1388
    %v1824 = vunpack.c.h.b16 %v1388
    %v1825 = vunpack.c.l.b16 %v1389
    %v1826 = vunpack.c.l.b16 %v1390
    %v1827 = vunpack.c.h.b16 %v1390
    %v1828 = vunpack.c.l.b16 %v1391
    %v1829 = vunpack.c.h.b16 %v1391
    %v1830 = vunpack.c.l.b16 %v1392
    %v1831 = vunpack.c.l.b16 %v1393
    %v1832 = vunpack.c.h.b16 %v1393
    %v1833 = vunpack.c.l.b16 %v1394
    %v1834 = vunpack.c.h.b16 %v1394
    %v1835 = vunpack.c.l.b16 %v1395
    %v1836 = vunpack.c.l.b16 %v1396
    %v1837 = vunpack.c.h.b16 %v1396
    %v1838 = vunpack.c.l.b16 %v1397
    %v1839 = vunpack.c.h.b16 %v1397
    %v1840 = vunpack.c.l.b16 %v1398
    %v1841 = vunpack.c.l.b16 %v1399
    %v1842 = vunpack.c.h.b16 %v1399
    %v1843 = vunpack.c.l.b16 %v1400
    %v1844 = vunpack.c.h.b16 %v1400
    %v1845 = vunpack.c.l.b16 %v1401
    %v1846 = vunpack.c.l.b16 %v1402
    %v1847 = vunpack.c.h.b16 %v1402
    %v1848 = vunpack.c.l.b16 %v1403
    %v1849 = vunpack.c.h.b16 %v1403
    %v1850 = vunpack.c.l.b16 %v1404
    %v1851 = vunpack.c.l.b16 %v1405
    %v1852 = vunpack.c.h.b16 %v1405
    %v1853 = vunpack.c.l.b16 %v1406
    %v1854 = vunpack.c.h.b16 %v1406
    %v1855 = vunpack.c.l.b16 %v1407
    %v1856 = vunpack.c.l.b16 %v1408
    %v1857 = vunpack.c.h.b16 %v1408
    %v1858 = vunpack.c.l.b16 %v1409
    %v1859 = vunpack.c.h.b16 %v1409
    %v1860 = vunpack.c.l.b16 %v1410
    %v1861 = vunpack.c.l.b16 %v1411
    %v1862 = vunpack.c.h.b16 %v1411
    %v1863 = vunpack.c.l.b16 %v1412
    %v1864 = vunpack.c.h.b16 %v1412
    %v1865 = vunpack.c.l.b16 %v1413
    %v1866 = vunpack.c.l.b16 %v1414
    %v1867 = vunpack.c.h.b16 %v1414
    %v1868 = vunpack.c.l.b16 %v1415
    %v1869 = vunpack.c.h.b16 %v1415
    %v1870 = vunpack.c.l.b16 %v1416
    %v1871 = vunpack.c.l.b16 %v1417
    %v1872 = vunpack.c.h.b16 %v1417
    %v1873 = vunpack.c.l.b16 %v1418
    %v1874 = vunpack.c.h.b16 %v1418
    %v1875 = vunpack.c.l.b16 %v1419
    %v1876 = vunpack.c.l.b16 %v1420
    %v1877 = vunpack.c.h.b16 %v1420
    %v1878 = vunpack.c.l.b16 %v1421
    %v1879 = vunpack.c.h.b16 %v1421
    %v1880 = vunpack.c.l.b16 %v1422
    %v1881 = vunpack.c.l.b16 %v1423
    %v1882 = vunpack.c.h.b16 %v1423
    %v1883 = vunpack.c.l.b16 %v1424
    %v1884 = vunpack.c.h.b16 %v1424
    %v1885 = vunpack.c.l.b16 %v1425
    %v1886 = vunpack.c.l.b16 %v1426
    %v1887 = vunpack.c.h.b16 %v1426
    %v1888 = vunpack.c.l.b16 %v1427
    %v1889 = vunpack.c.h.b16 %v1427
    %v1890 = vunpack.c.l.b16 %v1428
    %v1891 = vunpack.c.l.b16 %v1429
    %v1892 = vunpack.c.h.b16 %v1429
    %v1893 = vunpack.c.l.b16 %v1430
    %v1894 = vunpack.c.h.b16 %v1430
    %v1895 = vunpack.c.l.b16 %v1431
    %v1896 = vunpack.c.l.b16 %v1432
    %v1897 = vunpack.c.h.b16 %v1432
    %v1898 = vunpack.c.l.b16 %v1433
    %v1899 = vunpack.c.h.b16 %v1433
    %v1900 = vunpack.c.l.b16 %v1434
    %v1901 = vunpack.c.l.b16 %v1435
    %v1902 = vunpack.c.h.b16 %v1435
    %v1903 = vunpack.c.l.b16 %v1436
    %v1904 = vunpack.c.h.b16 %v1436
    %v1905 = vunpack.c.l.b16 %v1437
    %v1906 = vunpack.c.l.b16 %v1438
    %v1907 = vunpack.c.h.b16 %v1438
    %v1908 = vunpack.c.l.b16 %v1439
    %v1909 = vunpack.c.h.b16 %v1439
    %v1910 = vunpack.c.l.b16 %v1440
    %v1911 = vunpack.c.l.b16 %v1441
    %v1912 = vunpack.c.h.b16 %v1441
    %v1913 = vunpack.c.l.b16 %v1442
    %v1914 = vunpack.c.h.b16 %v1442
    %v1915 = vunpack.c.l.b16 %v1443
    %v1916 = vunpack.c.l.b16 %v1444
    %v1917 = vunpack.c.h.b16 %v1444
    %v1918 = vunpack.c.l.b16 %v1445
    %v1919 = vunpack.c.h.b16 %v1445
    %v1920 = vunpack.c.l.b16 %v1446
    %v1921 = vunpack.c.l.b16 %v1447
    %v1922 = vunpack.c.h.b16 %v1447
    %v1923 = vunpack.c.l.b16 %v1448
    %v1924 = vunpack.c.h.b16 %v1448
    %v1925 = vunpack.c.l.b16 %v1449
    %v1926 = vunpack.c.l.b16 %v1450
    %v1927 = vunpack.c.h.b16 %v1450
    %v1928 = vunpack.c.l.b16 %v1451
    %v1929 = vunpack.c.h.b16 %v1451
    %v1930 = vunpack.c.l.b16 %v1452
    %v1931 = vunpack.c.l.b16 %v1453
    %v1932 = vunpack.c.h.b16 %v1453
    %v1933 = vunpack.c.l.b16 %v1454
    %v1934 = vunpack.c.h.b16 %v1454
    %v1935 = vunpack.c.l.b16 %v1455
    %v1936 = vunpack.c.l.b16 %v1456
    %v1937 = vunpack.c.h.b16 %v1456
    %v1938 = vunpack.c.l.b16 %v1457
    %v1939 = vunpack.c.h.b16 %v1457
    %v1940 = vunpack.c.l.b16 %v1458
    %v1941 = vunpack.c.l.b16 %v1459
    %v1942 = vunpack.c.h.b16 %v1459
    %v1943 = vunpack.c.l.b16 %v1460
    %v1944 = vunpack.c.h.b16 %v1460
    %v1945 = vunpack.c.l.b16 %v1461
    %v1946 = vunpack.c.l.b16 %v1462
    %v1947 = vunpack.c.h.b16 %v1462
    %v1948 = vunpack.c.l.b16 %v1463
    %v1949 = vunpack.c.h.b16 %v1463
    %v1950 = vunpack.c.l.b16 %v1464
    %v1951 = vunpack.c.l.b16 %v1465
    %v1952 = vunpack.c.h.b16 %v1465
    %v1953 = vunpack.c.l.b16 %v1466
    %v1954 = vunpack.c.h.b16 %v1466
    %v1955 = vunpack.c.l.b16 %v1467
    %v1956 = vunpack.c.l.b16 %v1468
    %v1957 = vunpack.c.h.b16 %v1468
    %v1958 = vunpack.c.l.b16 %v1469
    %v1959 = vunpack.c.h.b16 %v1469
    %v1960 = vunpack.c.l.b16 %v1470
    %v1961 = vunpack.c.l.b16 %v1471
    %v1962 = vunpack.c.h.b16 %v1471
    %v1963 = vunpack.c.l.b16 %v1472
    %v1964 = vunpack.c.h.b16 %v1472
    %v1965 = vunpack.c.l.b16 %v1473
    %v1966 = vunpack.c.l.b16 %v1474
    %v1967 = vunpack.c.h.b16 %v1474
    %v1968 = vunpack.c.l.b16 %v1475
    %v1969 = vunpack.c.h.b16 %v1475
    %v1970 = vunpack.c.l.b16 %v1476
    %v1971 = vunpack.c.l.b16 %v1477
    %v1972 = vunpack.c.h.b16 %v1477
    %v1973 = vunpack.c.l.b16 %v1478
    %v1974 = vunpack.c.h.b16 %v1478
    %v1975 = vunpack.c.l.b16 %v1479
    %v1976 = vunpack.c.l.b16 %v1480
    %v1977 = vunpack.c.h.b16 %v1480
    %v1978 = vunpack.c.l.b16 %v1481
    %v1979 = vunpack.c.h.b16 %v1481
    %v1980 = vunpack.c.l.b16 %v1482
    %v1981 = vunpack.c.l.b16 %v1483
    %v1982 = vunpack.c.h.b16 %v1483
    %v1983 = vunpack.c.l.b16 %v1484
    %v1984 = vunpack.c.h.b16 %v1484
    %v1985 = vunpack.c.l.b16 %v1485
    %v1986 = vunpack.c.l.b16 %v1486
    %v1987 = vunpack.c.h.b16 %v1486
    %v1988 = vunpack.c.l.b16 %v1487
    %v1989 = vunpack.c.h.b16 %v1487
    %v1990 = vunpack.c.l.b16 %v1488
    %v1991 = vunpack.c.l.b16 %v1489
    %v1992 = vunpack.c.h.b16 %v1489
    %v1993 = vunpack.c.l.b16 %v1490
    %v1994 = vunpack.c.h.b16 %v1490
    %v1995 = vunpack.c.l.b16 %v1491
    %v1996 = vunpack.c.l.b16 %v1492
    %v1997 = vunpack.c.h.b16 %v1492
    %v1998 = vunpack.c.l.b16 %v1493
    %v1999 = vunpack.c.h.b16 %v1493
    %v2000 = vunpack.c.l.b16 %v1494
    %v2001 = vunpack.c.l.b16 %v1495
    %v2002 = vunpack.c.h.b16 %v1495
    %v2003 = vunpack.c.l.b16 %v1496
    %v2004 = vunpack.c.h.b16 %v1496
    %v2005 = vunpack.c.l.b16 %v1497
    %v2006 = vunpack.c.l.b16 %v1498
    %v2007 = vunpack.c.h.b16 %v1498
    %v2008 = vunpack.c.l.b16 %v1499
    %v2009 = vunpack.c.h.b16 %v1499
    %v2010 = vunpack.c.l.b16 %v1500
    %v2011 = vunpack.c.l.b16 %v1501
    %v2012 = vunpack.c.h.b16 %v1501
    %v2013 = vunpack.c.l.b16 %v1502
    %v2014 = vunpack.c.h.b16 %v1502
    %v2015 = vunpack.c.l.b16 %v1503
    %v2016 = vunpack.c.l.b16 %v1504
    %v2017 = vunpack.c.h.b16 %v1504
    %v2018 = vunpack.c.l.b16 %v1505
    %v2019 = vunpack.c.h.b16 %v1505
    %v2020 = vunpack.c.l.b16 %v1506
    %v2021 = vunpack.c.l.b16 %v1507
    %v2022 = vunpack.c.h.b16 %v1507
    %v2023 = vunpack.c.l.b16 %v1508
    %v2024 = vunpack.c.h.b16 %v1508
    %v2025 = vunpack.c.l.b16 %v1509
    %v2026 = vunpack.c.l.b16 %v1510
    %v2027 = vunpack.c.h.b16 %v1510
    %v2028 = vunpack.c.l.b16 %v1511
    %v2029 = vunpack.c.h.b16 %v1511
    %v2030 = vunpack.c.l.b16 %v1512
    %v2031 = vunpack.c.l.b16 %v1513
    %v2032 = vunpack.c.h.b16 %v1513
    %v2033 = vunpack.c.l.b16 %v1514
    %v2034 = vunpack.c.h.b16 %v1514
    %v2035 = vunpack.c.l.b16 %v1515
    %v2036 = vunpack.c.l.b16 %v1516
    %v2037 = vunpack.c.h.b16 %v1516
    %v2038 = vunpack.c.l.b16 %v1517
    %v2039 = vunpack.c.h.b16 %v1517
    %v2040 = vunpack.c.l.b16 %v1518
    %v2041 = vunpack.c.l.b16 %v1519
    %v2042 = vunpack.c.h.b16 %v1519
    %v2043 = vunpack.c.l.b16 %v1520
    %v2044 = vunpack.c.h.b16 %v1520
    %v2045 = vunpack.c.l.b16 %v1521
    %v2046 = vpack.c.b16 %v1731, %v1726
    %v2047 = vpack.c.b16 %v1732, %v1727
    %v2048 = vpack.c.b16 %v1733, %v1728
    %v2049 = vpack.c.b16 %v1734, %v1729
    %v2050 = vpack.c.b16 %v1735, %v1730
    %v2051 = vpack.c.b16 %v1741, %v1736
    %v2052 = vpack.c.b16 %v1742, %v1737
    %v2053 = vpack.c.b16 %v1743, %v1738
    %v2054 = vpack.c.b16 %v1744, %v1739
    %v2055 = vpack.c.b16 %v1745, %v1740
    %v2056 = vpack.c.b16 %v1751, %v1746
    %v2057 = vpack.c.b16 %v1752, %v1747
    %v2058 = vpack.c.b16 %v1753, %v1748
    %v2059 = vpack.c.b16 %v1754, %v1749
    %v2060 = vpack.c.b16 %v1755, %v1750
    %v2061 = vpack.c.b16 %v1761, %v1756
    %v2062 = vpack.c.b16 %v1762, %v1757
    %v2063 = vpack.c.b16 %v1763, %v1758
    %v2064 = vpack.c.b16 %v1764, %v1759
    %v2065 = vpack.c.b16 %v1765, %v1760
    %v2066 = vpack.c.b16 %v1771, %v1766
    %v2067 = vpack.c.b16 %v1772, %v1767
    %v2068 = vpack.c.b16 %v1773, %v1768
    %v2069 = vpack.c.b16 %v1774, %v1769
    %v2070 = vpack.c.b16 %v1775, %v1770
    %v2071 = vpack.c.b16 %v1781, %v1776
    %v2072 = vpack.c.b16 %v1782, %v1777
    %v2073 = vpack.c.b16 %v1783, %v1778
    %v2074 = vpack.c.b16 %v1784, %v1779
    %v2075 = vpack.c.b16 %v1785, %v1780
    %v2076 = vpack.c.b16 %v1791, %v1786
    %v2077 = vpack.c.b16 %v1792, %v1787
    %v2078 = vpack.c.b16 %v1793, %v1788
    %v2079 = vpack.c.b16 %v1794, %v1789
    %v2080 = vpack.c.b16 %v1795, %v1790
    %v2081 = vpack.c.b16 %v1801, %v1796
    %v2082 = vpack.c.b16 %v1802, %v1797
    %v2083 = vpack.c.b16 %v1803, %v1798
    %v2084 = vpack.c.b16 %v1804, %v1799
    %v2085 = vpack.c.b16 %v1805, %v1800
    %v2086 = vpack.c.b16 %v1811, %v1806
    %v2087 = vpack.c.b16 %v1812, %v1807
    %v2088 = vpack.c.b16 %v1813, %v1808
    %v2089 = vpack.c.b16 %v1814, %v1809
    %v2090 = vpack.c.b16 %v1815, %v1810
    %v2091 = vpack.c.b16 %v1821, %v1816
    %v2092 = vpack.c.b16 %v1822, %v1817
    %v2093 = vpack.c.b16 %v1823, %v1818
    %v2094 = vpack.c.b16 %v1824, %v1819
    %v2095 = vpack.c.b16 %v1825, %v1820
    %v2096 = vpack.c.b16 %v1831, %v1826
    %v2097 = vpack.c.b16 %v1832, %v1827
    %v2098 = vpack.c.b16 %v1833, %v1828
    %v2099 = vpack.c.b16 %v1834, %v1829
    %v2100 = vpack.c.b16 %v1835, %v1830
    %v2101 = vpack.c.b16 %v1841, %v1836
    %v2102 = vpack.c.b16 %v1842, %v1837
    %v2103 = vpack.c.b16 %v1843, %v1838
    %v2104 = vpack.c.b16 %v1844, %v1839
    %v2105 = vpack.c.b16 %v1845, %v1840
    %v2106 = vpack.c.b16 %v1851, %v1846
    %v2107 = vpack.c.b16 %v1852, %v1847
    %v2108 = vpack.c.b16 %v1853, %v1848
    %v2109 = vpack.c.b16 %v1854, %v1849
    %v2110 = vpack.c.b16 %v1855, %v1850
    %v2111 = vpack.c.b16 %v1861, %v1856
    %v2112 = vpack.c.b16 %v1862, %v1857
    %v2113 = vpack.c.b16 %v1863, %v1858
    %v2114 = vpack.c.b16 %v1864, %v1859
    %v2115 = vpack.c.b16 %v1865, %v1860
    %v2116 = vpack.c.b16 %v1871, %v1866
    %v2117 = vpack.c.b16 %v1872, %v1867
    %v2118 = vpack.c.b16 %v1873, %v1868
    %v2119 = vpack.c.b16 %v1874, %v1869
    %v2120 = vpack.c.b16 %v1875, %v1870
    %v2121 = vpack.c.b16 %v1881, %v1876
    %v2122 = vpack.c.b16 %v1882, %v1877
    %v2123 = vpack.c.b16 %v1883, %v1878
    %v2124 = vpack.c.b16 %v1884, %v1879
    %v2125 = vpack.c.b16 %v1885, %v1880
    %v2126 = vpack.c.b16 %v1891, %v1886
    %v2127 = vpack.c.b16 %v1892, %v1887
    %v2128 = vpack.c.b16 %v1893, %v1888
    %v2129 = vpack.c.b16 %v1894, %v1889
    %v2130 = vpack.c.b16 %v1895, %v1890
    %v2131 = vpack.c.b16 %v1901, %v1896
    %v2132 = vpack.c.b16 %v1902, %v1897
    %v2133 = vpack.c.b16 %v1903, %v1898
    %v2134 = vpack.c.b16 %v1904, %v1899
    %v2135 = vpack.c.b16 %v1905, %v1900
    %v2136 = vpack.c.b16 %v1911, %v1906
    %v2137 = vpack.c.b16 %v1912, %v1907
    %v2138 = vpack.c.b16 %v1913, %v1908
    %v2139 = vpack.c.b16 %v1914, %v1909
    %v2140 = vpack.c.b16 %v1915, %v1910
    %v2141 = vpack.c.b16 %v1921, %v1916
    %v2142 = vpack.c.b16 %v1922, %v1917
    %v2143 = vpack.c.b16 %v1923, %v1918
    %v2144 = vpack.c.b16 %v1924, %v1919
    %v2145 = vpack.c.b16 %v1925, %v1920
    %v2146 = vpack.c.b16 %v1931, %v1926
    %v2147 = vpack.c.b16 %v1932, %v1927
    %v2148 = vpack.c.b16 %v1933, %v1928
    %v2149 = vpack.c.b16 %v1934, %v1929
    %v2150 = vpack.c.b16 %v1935, %v1930
    %v2151 = vpack.c.b16 %v1941, %v1936
    %v2152 = vpack.c.b16 %v1942, %v1937
    %v2153 = vpack.c.b16 %v1943, %v1938
    %v2154 = vpack.c.b16 %v1944, %v1939
    %v2155 = vpack.c.b16 %v1945, %v1940
    %v2156 = vpack.c.b16 %v1951, %v1946
    %v2157 = vpack.c.b16 %v1952, %v1947
    %v2158 = vpack.c.b16 %v1953, %v1948
    %v2159 = vpack.c.b16 %v1954, %v1949
    %v2160 = vpack.c.b16 %v1955, %v1950
    %v2161 = vpack.c.b16 %v1961, %v1956
    %v2162 = vpack.c.b16 %v1962, %v1957
    %v2163 = vpack.c.b16 %v1963, %v1958
    %v2164 = vpack.c.b16 %v1964, %v1959
    %v2165 = vpack.c.b16 %v1965, %v1960
    %v2166 = vpack.c.b16 %v1971, %v1966
    %v2167 = vpack.c.b16 %v1972, %v1967
    %v2168 = vpack.c.b16 %v1973, %v1968
    %v2169 = vpack.c.b16 %v1974, %v1969
    %v2170 = vpack.c.b16 %v1975, %v1970
    %v2171 = vpack.c.b16 %v1981, %v1976
    %v2172 = vpack.c.b16 %v1982, %v1977
    %v2173 = vpack.c.b16 %v1983, %v1978
    %v2174 = vpack.c.b16 %v1984, %v1979
    %v2175 = vpack.c.b16 %v1985, %v1980
    %v2176 = vpack.c.b16 %v1991, %v1986
    %v2177 = vpack.c.b16 %v1992, %v1987
    %v2178 = vpack.c.b16 %v1993, %v1988
    %v2179 = vpack.c.b16 %v1994, %v1989
    %v2180 = vpack.c.b16 %v1995, %v1990
    %v2181 = vpack.c.b16 %v2001, %v1996
    %v2182 = vpack.c.b16 %v2002, %v1997
    %v2183 = vpack.c.b16 %v2003, %v1998
    %v2184 = vpack.c.b16 %v2004, %v1999
    %v2185 = vpack.c.b16 %v2005, %v2000
    %v2186 = vpack.c.b16 %v2011, %v2006
    %v2187 = vpack.c.b16 %v2012, %v2007
    %v2188 = vpack.c.b16 %v2013, %v2008
    %v2189 = vpack.c.b16 %v2014, %v2009
    %v2190 = vpack.c.b16 %v2015, %v2010
    %v2191 = vpack.c.b16 %v2021, %v2016
    %v2192 = vpack.c.b16 %v2022, %v2017
    %v2193 = vpack.c.b16 %v2023, %v2018
    %v2194 = vpack.c.b16 %v2024, %v2019
    %v2195 = vpack.c.b16 %v2025, %v2020
    %v2196 = vpack.c.b16 %v2031, %v2026
    %v2197 = vpack.c.b16 %v2032, %v2027
    %v2198 = vpack.c.b16 %v2033, %v2028
    %v2199 = vpack.c.b16 %v2034, %v2029
    %v2200 = vpack.c.b16 %v2035, %v2030
    %v2201 = vpack.c.b16 %v2041, %v2036
    %v2202 = vpack.c.b16 %v2042, %v2037
    %v2203 = vpack.c.b16 %v2043, %v2038
    %v2204 = vpack.c.b16 %v2044, %v2039
    %v2205 = vpack.c.b16 %v2045, %v2040
    %2366 = vmatpush.bf16.msra.mxu0 %v2081
    %2367 = vmatpush.bf16.msra.mxu0 %v2076
    %2368 = vmatpush.bf16.msra.mxu0 %v2071
    %2369 = vmatpush.bf16.msra.mxu0 %v2066
    %2370 = vmatpush.bf16.msra.mxu0 %v2061
    %2371 = vmatpush.bf16.msra.mxu0 %v2056
    %2372 = vmatpush.bf16.msra.mxu0 %v2051
    %2373 = vmatpush.bf16.msra.mxu0 %v2046
    %2374 = vmatmul.bf16.gmra.mxu0 %v1326
    %v2375 = vpop.f32.mrf.mxu0
    %v2376 = vadd.f32 %v1524, %v2375
    %v2377 = vpop.f32.mrf.mxu0
    %2378 = vdwg.mxu0
    %2379 = vmatpush.bf16.msra.mxu0 %v2121
    %2380 = vmatpush.bf16.msra.mxu0 %v2116
    %2381 = vmatpush.bf16.msra.mxu0 %v2111
    %2382 = vmatpush.bf16.msra.mxu0 %v2106
    %2383 = vmatpush.bf16.msra.mxu0 %v2101
    %2384 = vmatpush.bf16.msra.mxu0 %v2096
    %2385 = vmatpush.bf16.msra.mxu0 %v2091
    %2386 = vmatpush.bf16.msra.mxu0 %v2086
    %2387 = vmatmul.bf16.gmra.mxu0 %v1327
    %v2388 = vpop.f32.mrf.mxu0
    %v2389 = vadd.f32 %v2376, %v2388
    %v2390 = vpop.f32.mrf.mxu0
    %2391 = vdwg.mxu0
    %2392 = vmatpush.bf16.msra.mxu0 %v2161
    %2393 = vmatpush.bf16.msra.mxu0 %v2156
    %2394 = vmatpush.bf16.msra.mxu0 %v2151
    %2395 = vmatpush.bf16.msra.mxu0 %v2146
    %2396 = vmatpush.bf16.msra.mxu0 %v2141
    %2397 = vmatpush.bf16.msra.mxu0 %v2136
    %2398 = vmatpush.bf16.msra.mxu0 %v2131
    %2399 = vmatpush.bf16.msra.mxu0 %v2126
    %2400 = vmatmul.bf16.gmra.mxu0 %v1328
    %v2401 = vpop.f32.mrf.mxu0
    %v2402 = vadd.f32 %v2389, %v2401
    %v2403 = vpop.f32.mrf.mxu0
    %2404 = vdwg.mxu0
    %2405 = vmatpush.bf16.msra.mxu0 %v2201
    %2406 = vmatpush.bf16.msra.mxu0 %v2196
    %2407 = vmatpush.bf16.msra.mxu0 %v2191
    %2408 = vmatpush.bf16.msra.mxu0 %v2186
    %2409 = vmatpush.bf16.msra.mxu0 %v2181
    %2410 = vmatpush.bf16.msra.mxu0 %v2176
    %2411 = vmatpush.bf16.msra.mxu0 %v2171
    %2412 = vmatpush.bf16.msra.mxu0 %v2166
    %2413 = vmatmul.bf16.gmra.mxu0 %v1329
    %v2414 = vpop.f32.mrf.mxu0
    %v2415 = vadd.f32 %v2402, %v2414
    %v2416 = vpop.f32.mrf.mxu0
    %2417 = vdwg.mxu0
    %2418 = vmatpush.bf16.msra.mxu0 %v2082
    %2419 = vmatpush.bf16.msra.mxu0 %v2077
    %2420 = vmatpush.bf16.msra.mxu0 %v2072
    %2421 = vmatpush.bf16.msra.mxu0 %v2067
    %2422 = vmatpush.bf16.msra.mxu0 %v2062
    %2423 = vmatpush.bf16.msra.mxu0 %v2057
    %2424 = vmatpush.bf16.msra.mxu0 %v2052
    %2425 = vmatpush.bf16.msra.mxu0 %v2047
    %2426 = vmatmul.bf16.gmra.mxu0 %v1326
    %v2427 = vpop.f32.mrf.mxu0
    %v2428 = vadd.f32 %v1525, %v2427
    %v2429 = vpop.f32.mrf.mxu0
    %2430 = vdwg.mxu0
    %2431 = vmatpush.bf16.msra.mxu0 %v2122
    %2432 = vmatpush.bf16.msra.mxu0 %v2117
    %2433 = vmatpush.bf16.msra.mxu0 %v2112
    %2434 = vmatpush.bf16.msra.mxu0 %v2107
    %2435 = vmatpush.bf16.msra.mxu0 %v2102
    %2436 = vmatpush.bf16.msra.mxu0 %v2097
    %2437 = vmatpush.bf16.msra.mxu0 %v2092
    %2438 = vmatpush.bf16.msra.mxu0 %v2087
    %2439 = vmatmul.bf16.gmra.mxu0 %v1327
    %v2440 = vpop.f32.mrf.mxu0
    %v2441 = vadd.f32 %v2428, %v2440
    %v2442 = vpop.f32.mrf.mxu0
    %2443 = vdwg.mxu0
    %2444 = vmatpush.bf16.msra.mxu0 %v2162
    %2445 = vmatpush.bf16.msra.mxu0 %v2157
    %2446 = vmatpush.bf16.msra.mxu0 %v2152
    %2447 = vmatpush.bf16.msra.mxu0 %v2147
    %2448 = vmatpush.bf16.msra.mxu0 %v2142
    %2449 = vmatpush.bf16.msra.mxu0 %v2137
    %2450 = vmatpush.bf16.msra.mxu0 %v2132
    %2451 = vmatpush.bf16.msra.mxu0 %v2127
    %2452 = vmatmul.bf16.gmra.mxu0 %v1328
    %v2453 = vpop.f32.mrf.mxu0
    %v2454 = vadd.f32 %v2441, %v2453
    %v2455 = vpop.f32.mrf.mxu0
    %2456 = vdwg.mxu0
    %2457 = vmatpush.bf16.msra.mxu0 %v2202
    %2458 = vmatpush.bf16.msra.mxu0 %v2197
    %2459 = vmatpush.bf16.msra.mxu0 %v2192
    %2460 = vmatpush.bf16.msra.mxu0 %v2187
    %2461 = vmatpush.bf16.msra.mxu0 %v2182
    %2462 = vmatpush.bf16.msra.mxu0 %v2177
    %2463 = vmatpush.bf16.msra.mxu0 %v2172
    %2464 = vmatpush.bf16.msra.mxu0 %v2167
    %2465 = vmatmul.bf16.gmra.mxu0 %v1329
    %v2466 = vpop.f32.mrf.mxu0
    %v2467 = vadd.f32 %v2454, %v2466
    %v2468 = vpop.f32.mrf.mxu0
    %2469 = vdwg.mxu0
    %2470 = vmatpush.bf16.msra.mxu0 %v2083
    %2471 = vmatpush.bf16.msra.mxu0 %v2078
    %2472 = vmatpush.bf16.msra.mxu0 %v2073
    %2473 = vmatpush.bf16.msra.mxu0 %v2068
    %2474 = vmatpush.bf16.msra.mxu0 %v2063
    %2475 = vmatpush.bf16.msra.mxu0 %v2058
    %2476 = vmatpush.bf16.msra.mxu0 %v2053
    %2477 = vmatpush.bf16.msra.mxu0 %v2048
    %2478 = vmatmul.bf16.gmra.mxu0 %v1326
    %v2479 = vpop.f32.mrf.mxu0
    %v2480 = vadd.f32 %v1526, %v2479
    %v2481 = vpop.f32.mrf.mxu0
    %2482 = vdwg.mxu0
    %2483 = vmatpush.bf16.msra.mxu0 %v2123
    %2484 = vmatpush.bf16.msra.mxu0 %v2118
    %2485 = vmatpush.bf16.msra.mxu0 %v2113
    %2486 = vmatpush.bf16.msra.mxu0 %v2108
    %2487 = vmatpush.bf16.msra.mxu0 %v2103
    %2488 = vmatpush.bf16.msra.mxu0 %v2098
    %2489 = vmatpush.bf16.msra.mxu0 %v2093
    %2490 = vmatpush.bf16.msra.mxu0 %v2088
    %2491 = vmatmul.bf16.gmra.mxu0 %v1327
    %v2492 = vpop.f32.mrf.mxu0
    %v2493 = vadd.f32 %v2480, %v2492
    %v2494 = vpop.f32.mrf.mxu0
    %2495 = vdwg.mxu0
    %2496 = vmatpush.bf16.msra.mxu0 %v2163
    %2497 = vmatpush.bf16.msra.mxu0 %v2158
    %2498 = vmatpush.bf16.msra.mxu0 %v2153
    %2499 = vmatpush.bf16.msra.mxu0 %v2148
    %2500 = vmatpush.bf16.msra.mxu0 %v2143
    %2501 = vmatpush.bf16.msra.mxu0 %v2138
    %2502 = vmatpush.bf16.msra.mxu0 %v2133
    %2503 = vmatpush.bf16.msra.mxu0 %v2128
    %2504 = vmatmul.bf16.gmra.mxu0 %v1328
    %v2505 = vpop.f32.mrf.mxu0
    %v2506 = vadd.f32 %v2493, %v2505
    %v2507 = vpop.f32.mrf.mxu0
    %2508 = vdwg.mxu0
    %2509 = vmatpush.bf16.msra.mxu0 %v2203
    %2510 = vmatpush.bf16.msra.mxu0 %v2198
    %2511 = vmatpush.bf16.msra.mxu0 %v2193
    %2512 = vmatpush.bf16.msra.mxu0 %v2188
    %2513 = vmatpush.bf16.msra.mxu0 %v2183
    %2514 = vmatpush.bf16.msra.mxu0 %v2178
    %2515 = vmatpush.bf16.msra.mxu0 %v2173
    %2516 = vmatpush.bf16.msra.mxu0 %v2168
    %2517 = vmatmul.bf16.gmra.mxu0 %v1329
    %v2518 = vpop.f32.mrf.mxu0
    %v2519 = vadd.f32 %v2506, %v2518
    %v2520 = vpop.f32.mrf.mxu0
    %2521 = vdwg.mxu0
    %2522 = vmatpush.bf16.msra.mxu0 %v2084
    %2523 = vmatpush.bf16.msra.mxu0 %v2079
    %2524 = vmatpush.bf16.msra.mxu0 %v2074
    %2525 = vmatpush.bf16.msra.mxu0 %v2069
    %2526 = vmatpush.bf16.msra.mxu0 %v2064
    %2527 = vmatpush.bf16.msra.mxu0 %v2059
    %2528 = vmatpush.bf16.msra.mxu0 %v2054
    %2529 = vmatpush.bf16.msra.mxu0 %v2049
    %2530 = vmatmul.bf16.gmra.mxu0 %v1326
    %v2531 = vpop.f32.mrf.mxu0
    %v2532 = vadd.f32 %v1527, %v2531
    %v2533 = vpop.f32.mrf.mxu0
    %2534 = vdwg.mxu0
    %2535 = vmatpush.bf16.msra.mxu0 %v2124
    %2536 = vmatpush.bf16.msra.mxu0 %v2119
    %2537 = vmatpush.bf16.msra.mxu0 %v2114
    %2538 = vmatpush.bf16.msra.mxu0 %v2109
    %2539 = vmatpush.bf16.msra.mxu0 %v2104
    %2540 = vmatpush.bf16.msra.mxu0 %v2099
    %2541 = vmatpush.bf16.msra.mxu0 %v2094
    %2542 = vmatpush.bf16.msra.mxu0 %v2089
    %2543 = vmatmul.bf16.gmra.mxu0 %v1327
    %v2544 = vpop.f32.mrf.mxu0
    %v2545 = vadd.f32 %v2532, %v2544
    %v2546 = vpop.f32.mrf.mxu0
    %2547 = vdwg.mxu0
    %2548 = vmatpush.bf16.msra.mxu0 %v2164
    %2549 = vmatpush.bf16.msra.mxu0 %v2159
    %2550 = vmatpush.bf16.msra.mxu0 %v2154
    %2551 = vmatpush.bf16.msra.mxu0 %v2149
    %2552 = vmatpush.bf16.msra.mxu0 %v2144
    %2553 = vmatpush.bf16.msra.mxu0 %v2139
    %2554 = vmatpush.bf16.msra.mxu0 %v2134
    %2555 = vmatpush.bf16.msra.mxu0 %v2129
    %2556 = vmatmul.bf16.gmra.mxu0 %v1328
    %v2557 = vpop.f32.mrf.mxu0
    %v2558 = vadd.f32 %v2545, %v2557
    %v2559 = vpop.f32.mrf.mxu0
    %2560 = vdwg.mxu0
    %2561 = vmatpush.bf16.msra.mxu0 %v2204
    %2562 = vmatpush.bf16.msra.mxu0 %v2199
    %2563 = vmatpush.bf16.msra.mxu0 %v2194
    %2564 = vmatpush.bf16.msra.mxu0 %v2189
    %2565 = vmatpush.bf16.msra.mxu0 %v2184
    %2566 = vmatpush.bf16.msra.mxu0 %v2179
    %2567 = vmatpush.bf16.msra.mxu0 %v2174
    %2568 = vmatpush.bf16.msra.mxu0 %v2169
    %2569 = vmatmul.bf16.gmra.mxu0 %v1329
    %v2570 = vpop.f32.mrf.mxu0
    %v2571 = vadd.f32 %v2558, %v2570
    %v2572 = vpop.f32.mrf.mxu0
    %2573 = vdwg.mxu0
    %2574 = vmatpush.bf16.msra.mxu0 %v2085
    %2575 = vmatpush.bf16.msra.mxu0 %v2080
    %2576 = vmatpush.bf16.msra.mxu0 %v2075
    %2577 = vmatpush.bf16.msra.mxu0 %v2070
    %2578 = vmatpush.bf16.msra.mxu0 %v2065
    %2579 = vmatpush.bf16.msra.mxu0 %v2060
    %2580 = vmatpush.bf16.msra.mxu0 %v2055
    %2581 = vmatpush.bf16.msra.mxu0 %v2050
    %2582 = vmatmul.bf16.gmra.mxu0 %v1326
    %v2583 = vpop.f32.mrf.mxu0
    %v2584 = vadd.f32 %v1528, %v2583
    %v2585 = vpop.f32.mrf.mxu0
    %2586 = vdwg.mxu0
    %2587 = vmatpush.bf16.msra.mxu0 %v2125
    %2588 = vmatpush.bf16.msra.mxu0 %v2120
    %2589 = vmatpush.bf16.msra.mxu0 %v2115
    %2590 = vmatpush.bf16.msra.mxu0 %v2110
    %2591 = vmatpush.bf16.msra.mxu0 %v2105
    %2592 = vmatpush.bf16.msra.mxu0 %v2100
    %2593 = vmatpush.bf16.msra.mxu0 %v2095
    %2594 = vmatpush.bf16.msra.mxu0 %v2090
    %2595 = vmatmul.bf16.gmra.mxu0 %v1327
    %v2596 = vpop.f32.mrf.mxu0
    %v2597 = vadd.f32 %v2584, %v2596
    %v2598 = vpop.f32.mrf.mxu0
    %2599 = vdwg.mxu0
    %2600 = vmatpush.bf16.msra.mxu0 %v2165
    %2601 = vmatpush.bf16.msra.mxu0 %v2160
    %2602 = vmatpush.bf16.msra.mxu0 %v2155
    %2603 = vmatpush.bf16.msra.mxu0 %v2150
    %2604 = vmatpush.bf16.msra.mxu0 %v2145
    %2605 = vmatpush.bf16.msra.mxu0 %v2140
    %2606 = vmatpush.bf16.msra.mxu0 %v2135
    %2607 = vmatpush.bf16.msra.mxu0 %v2130
    %2608 = vmatmul.bf16.gmra.mxu0 %v1328
    %v2609 = vpop.f32.mrf.mxu0
    %v2610 = vadd.f32 %v2597, %v2609
    %v2611 = vpop.f32.mrf.mxu0
    %2612 = vdwg.mxu0
    %2613 = vmatpush.bf16.msra.mxu0 %v2205
    %2614 = vmatpush.bf16.msra.mxu0 %v2200
    %2615 = vmatpush.bf16.msra.mxu0 %v2195
    %2616 = vmatpush.bf16.msra.mxu0 %v2190
    %2617 = vmatpush.bf16.msra.mxu0 %v2185
    %2618 = vmatpush.bf16.msra.mxu0 %v2180
    %2619 = vmatpush.bf16.msra.mxu0 %v2175
    %2620 = vmatpush.bf16.msra.mxu0 %v2170
    %2621 = vmatmul.bf16.gmra.mxu0 %v1329
    %v2622 = vpop.f32.mrf.mxu0
    %v2623 = vadd.f32 %v2610, %v2622
    %v2624 = vpop.f32.mrf.mxu0
    %2625 = vdwg.mxu0
    %v2626 = vmax.f32 %v2415, 0.0
    %v2627 = vmax.f32 %v2467, 0.0
    %v2628 = vmax.f32 %v2519, 0.0
    %v2629 = vmax.f32 %v2571, 0.0
    %v2630 = vpack.c.bf16 %v2626, %v2626
    %v2631 = vpack.c.bf16 %v2627, %v2627
    %v2632 = vpack.c.bf16 %v2628, %v2628
    %v2633 = vpack.c.bf16 %v2629, %v2629
    %v2634 = vld [vmem:[#allocation10] sm:$0xf]
    %v2635 = vld [vmem:[#allocation10 + $0x4] sm:$0xf]
    %v2636 = vld [vmem:[#allocation10 + $0x8] sm:$0xf]
    %v2637 = vld [vmem:[#allocation10 + $0xc] sm:$0xf]
    %v2638 = vld [vmem:[#allocation10 + $0x10] sm:$0xf]
    %v2639 = vld [vmem:[#allocation10 + $0x14] sm:$0xf]
    %v2640 = vld [vmem:[#allocation10 + $0x18] sm:$0xf]
    %v2641 = vld [vmem:[#allocation10 + $0x1c] sm:$0xf]
    %v2642 = vld [vmem:[#allocation10 + $0x20] sm:$0xf]
    %v2643 = vld [vmem:[#allocation10 + $0x24] sm:$0xf]
    %v2644 = vld [vmem:[#allocation10 + $0x28] sm:$0xf]
    %v2645 = vld [vmem:[#allocation10 + $0x2c] sm:$0xf]
    %v2646 = vld [vmem:[#allocation10 + $0x30] sm:$0xf]
    %v2647 = vld [vmem:[#allocation10 + $0x34] sm:$0xf]
    %v2648 = vld [vmem:[#allocation10 + $0x38] sm:$0xf]
    %v2649 = vld [vmem:[#allocation10 + $0x3c] sm:$0xf]
    %v2650 = vld [vmem:[#allocation10 + $0x40] sm:$0xf]
    %v2651 = vld [vmem:[#allocation10 + $0x44] sm:$0xf]
    %v2652 = vld [vmem:[#allocation10 + $0x48] sm:$0xf]
    %v2653 = vld [vmem:[#allocation10 + $0x4c] sm:$0xf]
    %v2654 = vld [vmem:[#allocation10 + $0x50] sm:$0xf]
    %v2655 = vld [vmem:[#allocation10 + $0x54] sm:$0xf]
    %v2656 = vld [vmem:[#allocation10 + $0x58] sm:$0xf]
    %v2657 = vld [vmem:[#allocation10 + $0x5c] sm:$0xf]
    %v2658 = vld [vmem:[#allocation10 + $0x60] sm:$0xf]
    %v2659 = vld [vmem:[#allocation10 + $0x64] sm:$0xf]
    %v2660 = vld [vmem:[#allocation10 + $0x68] sm:$0xf]
    %v2661 = vld [vmem:[#allocation10 + $0x6c] sm:$0xf]
    %v2662 = vld [vmem:[#allocation10 + $0x70] sm:$0xf]
    %v2663 = vld [vmem:[#allocation10 + $0x74] sm:$0xf]
    %v2664 = vld [vmem:[#allocation10 + $0x78] sm:$0xf]
    %v2665 = vld [vmem:[#allocation10 + $0x7c] sm:$0xf]
    %v2666 = vld [vmem:[#allocation10 + $0x80] sm:$0xf]
    %v2667 = vld [vmem:[#allocation10 + $0x84] sm:$0xf]
    %v2668 = vld [vmem:[#allocation10 + $0x88] sm:$0xf]
    %v2669 = vld [vmem:[#allocation10 + $0x8c] sm:$0xf]
    %v2670 = vld [vmem:[#allocation10 + $0x90] sm:$0xf]
    %v2671 = vld [vmem:[#allocation10 + $0x94] sm:$0xf]
    %v2672 = vld [vmem:[#allocation10 + $0x98] sm:$0xf]
    %v2673 = vld [vmem:[#allocation10 + $0x9c] sm:$0xf]
    %v2674 = vld [vmem:[#allocation10 + $0xa0] sm:$0xf]
    %v2675 = vld [vmem:[#allocation10 + $0xa4] sm:$0xf]
    %v2676 = vld [vmem:[#allocation10 + $0xa8] sm:$0xf]
    %v2677 = vld [vmem:[#allocation10 + $0xac] sm:$0xf]
    %v2678 = vld [vmem:[#allocation10 + $0xb0] sm:$0xf]
    %v2679 = vld [vmem:[#allocation10 + $0xb4] sm:$0xf]
    %v2680 = vld [vmem:[#allocation10 + $0xb8] sm:$0xf]
    %v2681 = vld [vmem:[#allocation10 + $0xbc] sm:$0xf]
    %v2682 = vld [vmem:[#allocation10 + $0xc0] sm:$0xf]
    %v2683 = vld [vmem:[#allocation10 + $0xc4] sm:$0xf]
    %v2684 = vld [vmem:[#allocation10 + $0xc8] sm:$0xf]
    %v2685 = vld [vmem:[#allocation10 + $0xcc] sm:$0xf]
    %v2686 = vld [vmem:[#allocation10 + $0xd0] sm:$0xf]
    %v2687 = vld [vmem:[#allocation10 + $0xd4] sm:$0xf]
    %v2688 = vld [vmem:[#allocation10 + $0xd8] sm:$0xf]
    %v2689 = vld [vmem:[#allocation10 + $0xdc] sm:$0xf]
    %v2690 = vld [vmem:[#allocation10 + $0xe0] sm:$0xf]
    %v2691 = vld [vmem:[#allocation10 + $0xe4] sm:$0xf]
    %v2692 = vld [vmem:[#allocation10 + $0xe8] sm:$0xf]
    %v2693 = vld [vmem:[#allocation10 + $0xec] sm:$0xf]
    %v2694 = vld [vmem:[#allocation10 + $0xf0] sm:$0xf]
    %v2695 = vld [vmem:[#allocation10 + $0xf4] sm:$0xf]
    %v2696 = vld [vmem:[#allocation10 + $0xf8] sm:$0xf]
    %v2697 = vld [vmem:[#allocation10 + $0xfc] sm:$0xf]
    %v2698 = vld [vmem:[#allocation11 + $0x9] sm:$0x1]
    %v2700 = vperm.slane %v2698, 0
    %v2766 = vunpack.c.l.b16 %v2634
    %v2767 = vunpack.c.l.b16 %v2635
    %v2768 = vunpack.c.l.b16 %v2636
    %v2769 = vunpack.c.l.b16 %v2637
    %v2770 = vunpack.c.l.b16 %v2638
    %v2771 = vunpack.c.l.b16 %v2639
    %v2772 = vunpack.c.l.b16 %v2640
    %v2773 = vunpack.c.l.b16 %v2641
    %v2774 = vunpack.c.l.b16 %v2642
    %v2775 = vunpack.c.l.b16 %v2643
    %v2776 = vunpack.c.l.b16 %v2644
    %v2777 = vunpack.c.l.b16 %v2645
    %v2778 = vunpack.c.l.b16 %v2646
    %v2779 = vunpack.c.l.b16 %v2647
    %v2780 = vunpack.c.l.b16 %v2648
    %v2781 = vunpack.c.l.b16 %v2649
    %v2782 = vunpack.c.l.b16 %v2650
    %v2783 = vunpack.c.l.b16 %v2651
    %v2784 = vunpack.c.l.b16 %v2652
    %v2785 = vunpack.c.l.b16 %v2653
    %v2786 = vunpack.c.l.b16 %v2654
    %v2787 = vunpack.c.l.b16 %v2655
    %v2788 = vunpack.c.l.b16 %v2656
    %v2789 = vunpack.c.l.b16 %v2657
    %v2790 = vunpack.c.l.b16 %v2658
    %v2791 = vunpack.c.l.b16 %v2659
    %v2792 = vunpack.c.l.b16 %v2660
    %v2793 = vunpack.c.l.b16 %v2661
    %v2794 = vunpack.c.l.b16 %v2662
    %v2795 = vunpack.c.l.b16 %v2663
    %v2796 = vunpack.c.l.b16 %v2664
    %v2797 = vunpack.c.l.b16 %v2665
    %v2798 = vunpack.c.l.b16 %v2666
    %v2799 = vunpack.c.l.b16 %v2667
    %v2800 = vunpack.c.l.b16 %v2668
    %v2801 = vunpack.c.l.b16 %v2669
    %v2802 = vunpack.c.l.b16 %v2670
    %v2803 = vunpack.c.l.b16 %v2671
    %v2804 = vunpack.c.l.b16 %v2672
    %v2805 = vunpack.c.l.b16 %v2673
    %v2806 = vunpack.c.l.b16 %v2674
    %v2807 = vunpack.c.l.b16 %v2675
    %v2808 = vunpack.c.l.b16 %v2676
    %v2809 = vunpack.c.l.b16 %v2677
    %v2810 = vunpack.c.l.b16 %v2678
    %v2811 = vunpack.c.l.b16 %v2679
    %v2812 = vunpack.c.l.b16 %v2680
    %v2813 = vunpack.c.l.b16 %v2681
    %v2814 = vunpack.c.l.b16 %v2682
    %v2815 = vunpack.c.l.b16 %v2683
    %v2816 = vunpack.c.l.b16 %v2684
    %v2817 = vunpack.c.l.b16 %v2685
    %v2818 = vunpack.c.l.b16 %v2686
    %v2819 = vunpack.c.l.b16 %v2687
    %v2820 = vunpack.c.l.b16 %v2688
    %v2821 = vunpack.c.l.b16 %v2689
    %v2822 = vunpack.c.l.b16 %v2690
    %v2823 = vunpack.c.l.b16 %v2691
    %v2824 = vunpack.c.l.b16 %v2692
    %v2825 = vunpack.c.l.b16 %v2693
    %v2826 = vunpack.c.l.b16 %v2694
    %v2827 = vunpack.c.l.b16 %v2695
    %v2828 = vunpack.c.l.b16 %v2696
    %v2829 = vunpack.c.l.b16 %v2697
    %v2830 = vpack.c.b16 %v2767, %v2766
    %v2831 = vpack.c.b16 %v2769, %v2768
    %v2832 = vpack.c.b16 %v2771, %v2770
    %v2833 = vpack.c.b16 %v2773, %v2772
    %v2834 = vpack.c.b16 %v2775, %v2774
    %v2835 = vpack.c.b16 %v2777, %v2776
    %v2836 = vpack.c.b16 %v2779, %v2778
    %v2837 = vpack.c.b16 %v2781, %v2780
    %v2838 = vpack.c.b16 %v2783, %v2782
    %v2839 = vpack.c.b16 %v2785, %v2784
    %v2840 = vpack.c.b16 %v2787, %v2786
    %v2841 = vpack.c.b16 %v2789, %v2788
    %v2842 = vpack.c.b16 %v2791, %v2790
    %v2843 = vpack.c.b16 %v2793, %v2792
    %v2844 = vpack.c.b16 %v2795, %v2794
    %v2845 = vpack.c.b16 %v2797, %v2796
    %v2846 = vpack.c.b16 %v2799, %v2798
    %v2847 = vpack.c.b16 %v2801, %v2800
    %v2848 = vpack.c.b16 %v2803, %v2802
    %v2849 = vpack.c.b16 %v2805, %v2804
    %v2850 = vpack.c.b16 %v2807, %v2806
    %v2851 = vpack.c.b16 %v2809, %v2808
    %v2852 = vpack.c.b16 %v2811, %v2810
    %v2853 = vpack.c.b16 %v2813, %v2812
    %v2854 = vpack.c.b16 %v2815, %v2814
    %v2855 = vpack.c.b16 %v2817, %v2816
    %v2856 = vpack.c.b16 %v2819, %v2818
    %v2857 = vpack.c.b16 %v2821, %v2820
    %v2858 = vpack.c.b16 %v2823, %v2822
    %v2859 = vpack.c.b16 %v2825, %v2824
    %v2860 = vpack.c.b16 %v2827, %v2826
    %v2861 = vpack.c.b16 %v2829, %v2828
    %2894 = vmatpush.bf16.msra.mxu0 %v2837
    %2895 = vmatpush.bf16.msra.mxu0 %v2836
    %2896 = vmatpush.bf16.msra.mxu0 %v2835
    %2897 = vmatpush.bf16.msra.mxu0 %v2834
    %2898 = vmatpush.bf16.msra.mxu0 %v2833
    %2899 = vmatpush.bf16.msra.mxu0 %v2832
    %2900 = vmatpush.bf16.msra.mxu0 %v2831
    %2901 = vmatpush.bf16.msra.mxu0 %v2830
    %2902 = vmatmul.bf16.gmra.mxu0 %v2630
    %v2903 = vpop.f32.mrf.mxu0
    %v2904 = vadd.f32 %v2700, %v2903
    %v2905 = vpop.f32.mrf.mxu0
    %2906 = vdwg.mxu0
    %2907 = vmatpush.bf16.msra.mxu0 %v2845
    %2908 = vmatpush.bf16.msra.mxu0 %v2844
    %2909 = vmatpush.bf16.msra.mxu0 %v2843
    %2910 = vmatpush.bf16.msra.mxu0 %v2842
    %2911 = vmatpush.bf16.msra.mxu0 %v2841
    %2912 = vmatpush.bf16.msra.mxu0 %v2840
    %2913 = vmatpush.bf16.msra.mxu0 %v2839
    %2914 = vmatpush.bf16.msra.mxu0 %v2838
    %2915 = vmatmul.bf16.gmra.mxu0 %v2631
    %v2916 = vpop.f32.mrf.mxu0
    %v2917 = vadd.f32 %v2904, %v2916
    %v2918 = vpop.f32.mrf.mxu0
    %2919 = vdwg.mxu0
    %2920 = vmatpush.bf16.msra.mxu0 %v2853
    %2921 = vmatpush.bf16.msra.mxu0 %v2852
    %2922 = vmatpush.bf16.msra.mxu0 %v2851
    %2923 = vmatpush.bf16.msra.mxu0 %v2850
    %2924 = vmatpush.bf16.msra.mxu0 %v2849
    %2925 = vmatpush.bf16.msra.mxu0 %v2848
    %2926 = vmatpush.bf16.msra.mxu0 %v2847
    %2927 = vmatpush.bf16.msra.mxu0 %v2846
    %2928 = vmatmul.bf16.gmra.mxu0 %v2632
    %v2929 = vpop.f32.mrf.mxu0
    %v2930 = vadd.f32 %v2917, %v2929
    %v2931 = vpop.f32.mrf.mxu0
    %2932 = vdwg.mxu0
    %2933 = vmatpush.bf16.msra.mxu0 %v2861
    %2934 = vmatpush.bf16.msra.mxu0 %v2860
    %2935 = vmatpush.bf16.msra.mxu0 %v2859
    %2936 = vmatpush.bf16.msra.mxu0 %v2858
    %2937 = vmatpush.bf16.msra.mxu0 %v2857
    %2938 = vmatpush.bf16.msra.mxu0 %v2856
    %2939 = vmatpush.bf16.msra.mxu0 %v2855
    %2940 = vmatpush.bf16.msra.mxu0 %v2854
    %2941 = vmatmul.bf16.gmra.mxu0 %v2633
    %v2942 = vpop.f32.mrf.mxu0
    %v2943 = vadd.f32 %v2930, %v2942
    %v2944 = vpop.f32.mrf.mxu0
    %2945 = vdwg.mxu0
    %v2946 = vadd.f32 %v2943, %v2623
    %v2947 = vmax.f32 %v2946, 0.0
    %2948 = vst [vmem:[#allocation13] sm:$0xff] %v2947
    // Predicated region
    $region50: #{tpu_custom_call.1} parent=1 // pred_check
      _
    $region51: #{tpu_custom_call.1} parent=1 // pred_check_branch
      %2950 = sbr.rel (0) target = $region53
    $region52: #{tpu_custom_call.1} parent=1 // pred_region
      %2952 = vsyncadd [#allocation4], 0
      %s2954 = sshll.u32 [#allocation13], 4
      %s2955 = int_to_ptr.vmem [resolvable:$true] %s2954
      %s2956 = sshll.u32 %s6, 4
      %s2957 = int_to_ptr.hbm [resolvable:$true] %s2956
      %2959 = dma.vmem_to_hbm [thread:$0]  %s2955, 128, %s2957, [#allocation4]
    $region53: #{tpu_custom_call.1} parent=1 // pred_fallthru
      _
    // Predicated region
    $region54: #{tpu_custom_call.1} parent=1 // pred_check
      _
    $region55: #{tpu_custom_call.1} parent=1 // pred_check_branch
      %2961 = sbr.rel (0) target = $region57
    $region56: #{tpu_custom_call.1} parent=1 // pred_region
      %2963 = dma.done [#allocation4], 128
    $region57: #{tpu_custom_call.1} parent=1 // pred_fallthru
      _
    %2964 = vsyncpa [#allocation3], 1
    %2965 = vsyncpa [#allocation6], 1
    %2966 = vsyncpa [#allocation9], 1
    %2967 = vsyncpa [#allocation12], 1
    %2968 = vsyncpa [#allocation4], 1

</llo_original>
